<compile_context>
chip_gen: v7x
topology: tpu7x:2x2x1
jax: 0.10.0
libtpu: 0.0.40
codegen_flags: <defaults>
</compile_context>

<pallas_src>
import functools

import jax
import jax.numpy as jnp
from jax.experimental import pallas as pl
from jax.experimental.pallas import tpu as pltpu


def fire_kernel(xm_ref, xt_ref, xb_ref, wsq_ref, bsq_ref, wexp_ref, bexp_ref,
                out_ref, *, img_h):
    """One (batch, H-tile) grid step of the fused Fire forward.

    xm_ref  : (1, TH, W, Cin)  main tile, image rows [h*TH, h*TH+TH)
    xt_ref  : (1, 1,  W, Cin)  row h*TH-1   (index clamped at the border)
    xb_ref  : (1, 1,  W, Cin)  row h*TH+TH  (index clamped at the border)
    wsq_ref : (Cin, Csq)       squeeze weight (compute dtype)
    bsq_ref : (1, Csq)  f32    squeeze bias
    wexp_ref: (9*Csq, Cout)    packed expand weight, K order (kw, kh, cin);
                               expand1x1 occupies the center-tap rows.
    bexp_ref: (1, Cout) f32    [expand1x1 ; expand3x3] bias
    out_ref : (1, TH, W, Cout)
    """
    _, TH, W, Cin = xm_ref.shape
    Csq = wsq_ref.shape[1]
    Cout = wexp_ref.shape[1]
    cdt = wsq_ref.dtype
    h = pl.program_id(1)

    # ---- squeeze 1x1 conv (+bias, ReLU), f32 accumulation -------------------
    xm = xm_ref[0].astype(cdt).reshape(TH * W, Cin)
    sq_m = jnp.dot(xm, wsq_ref[...], preferred_element_type=jnp.float32)
    xh = jnp.concatenate([xt_ref[0], xb_ref[0]], axis=0).astype(cdt)
    sq_h = jnp.dot(xh.reshape(2 * W, Cin), wsq_ref[...],
                   preferred_element_type=jnp.float32)
    bsq = bsq_ref[...]
    sq_m = jnp.maximum(sq_m + bsq, 0.0).reshape(TH, W, Csq)
    sq_h = jnp.maximum(sq_h + bsq, 0.0).reshape(2, W, Csq)

    # ---- (TH+2, W, Csq) activation; zero rows that fall outside the image ---
    # (The 3x3 conv zero-pads the *activation*, so out-of-image halo rows and
    #  garbage rows of a ragged last tile must be exactly 0, not relu(bias).)
    s = jnp.concatenate([sq_h[0:1], sq_m, sq_h[1:2]], axis=0)
    grow = h * TH - 1 + jax.lax.broadcasted_iota(jnp.int32, (TH + 2, 1, 1), 0)
    s = jnp.where(jnp.logical_and(grow >= 0, grow < img_h), s, 0.0)

    # ---- horizontal (w +/- 1) taps: two cheap column shifts of the SMALL
    #      activation, composed in registers (no scratch, no masked stores) ---
    zcol = jnp.zeros((TH + 2, 1, Csq), s.dtype)
    s_l = jnp.concatenate([zcol, s[:, :W - 1, :]], axis=1)  # value at w-1 (kw=0)
    s_r = jnp.concatenate([s[:, 1:, :], zcol], axis=1)      # value at w+1 (kw=2)
    s, s_l, s_r = (a.astype(cdt) for a in (s, s_l, s_r))

    # ---- im2col slab (TH, W, 9*Csq): vertical taps are free outer-dim slices;
    #      K ordering (kw major, kh, cin minor) matches pack_fire_params -------
    slab = jnp.concatenate(
        [s_l[0:TH], s_l[1:TH + 1], s_l[2:TH + 2],
         s[0:TH],   s[1:TH + 1],   s[2:TH + 2],
         s_r[0:TH], s_r[1:TH + 1], s_r[2:TH + 2]], axis=-1)

    # ---- expand1x1 + expand3x3 fused into ONE wide-K MXU matmul -------------
    y = jnp.dot(slab.reshape(TH * W, 9 * Csq), wexp_ref[...],
                preferred_element_type=jnp.float32)
    y = jnp.maximum(y + bexp_ref[...], 0.0)
    out_ref[0] = y.reshape(TH, W, Cout).astype(out_ref.dtype)


def _round_up(x, m):
    return ((x + m - 1) // m) * m


def _sublane(dtype):
    return max(8, 32 // jnp.dtype(dtype).itemsize)   # 8 for f32, 16 for bf16


def _vmem_limit_bytes():
    cap = 128 * 1024 * 1024
    try:  # generation-aware (v7x has only 64 MiB physical VMEM)
        cap = int(getattr(pltpu.get_tpu_info(), "vmem_capacity_bytes", cap))
    except Exception:
        pass
    return int(min(max(cap // 2, 16 * 1024 * 1024), 64 * 1024 * 1024))


def _pick_block_h(H, W, Cin, Csq, Cout, in_dtype, compute_dtype, out_dtype,
                  budget_bytes):
    """Largest tile height whose hardware-padded VMEM working set fits.

    Rounds channel dims up to 128 lanes and second-minor dims up to the dtype
    sublane tile, counts double-buffered input/halo/output/weight blocks plus
    in-kernel live values; prefers sublane-aligned TH and does NOT require
    TH | H (the kernel masks the ragged last tile)."""
    ib = jnp.dtype(in_dtype).itemsize
    cb = jnp.dtype(compute_dtype).itemsize
    ob = jnp.dtype(out_dtype).itemsize
    K = 9 * Csq
    cin_l, csq_l, cout_l, k_l = (_round_up(c, 128) for c in (Cin, Csq, Cout, K))
    w_i = _round_up(W, _sublane(in_dtype))
    w_c = _round_up(W, _sublane(compute_dtype))
    w_o = _round_up(W, _sublane(out_dtype))
    sub_c = _sublane(compute_dtype)
    weights = 2 * ((_round_up(Cin, sub_c) * csq_l
                    + _round_up(K, sub_c) * cout_l) * cb
                   + 8 * (csq_l + cout_l) * 4)           # + f32 biases

    def est(th):
        x_in = 2 * th * w_i * cin_l * ib                 # main tile (x2 buffers)
        halo = 2 * 2 * w_i * cin_l * ib                  # two 1-row halos
        yout = 2 * th * w_o * cout_l * ob                # output tile (x2 buffers)
        s3 = 3 * (th + 2) * _round_up(W, 8) * csq_l * 4  # s, s_l, s_r (f32)
        slab = th * w_c * k_l * cb                       # im2col slab
        acc = _round_up(th * W, 8) * (cout_l + csq_l) * 4  # f32 matmul results
        return x_in + halo + yout + weights + s3 + slab + acc

    fits = [t for t in range(1, H + 1) if est(t) <= budget_bytes]
    if not fits:
        return 1
    if fits[-1] == H:
        return H
    aligned = [t for t in fits if t % 8 == 0]
    return max(aligned) if aligned else max(fits)


def pack_fire_params(wsq, bsq, we1, be1, we3, be3, *,
                     compute_dtype=jnp.bfloat16):
    """One-time packing of PyTorch-layout Conv2d parameters into the kernel's
    matmul operands (call once at init, reuse every step).

    Returns (wsq_k, bsq_k, wexp_k, bexp_k):
      wsq_k : (Cin, Csq)          squeeze weight
      bsq_k : (1, Csq)   f32      squeeze bias
      wexp_k: (9*Csq, Ce1+Ce3)    fused expand weight, row order (kw, kh, cin);
                                  cols [:Ce1] hold expand1x1 in the center-tap
                                  rows, cols [Ce1:] hold expand3x3.
      bexp_k: (1, Ce1+Ce3) f32    concatenated expand bias.
    """
    Csq, Cin = wsq.shape[0], wsq.shape[1]
    Ce1, Ce3 = we1.shape[0], we3.shape[0]
    Cout = Ce1 + Ce3
    wsq_k = jnp.transpose(wsq[:, :, 0, 0], (1, 0)).astype(compute_dtype)
    # (O, I, kh, kw) -> (kw, kh, I, O) -> (9*Csq, Ce3): row = (kw*3 + kh)*Csq + i
    we3_k = jnp.transpose(we3, (3, 2, 1, 0)).reshape(9 * Csq, Ce3)
    wexp = jnp.zeros((9 * Csq, Cout), jnp.float32)
    wexp = wexp.at[:, Ce1:].set(we3_k.astype(jnp.float32))
    wexp = wexp.at[4 * Csq:5 * Csq, :Ce1].set(
        jnp.transpose(we1[:, :, 0, 0], (1, 0)).astype(jnp.float32))
    wexp_k = wexp.astype(compute_dtype)
    bsq_k = bsq.reshape(1, Csq).astype(jnp.float32)
    bexp_k = jnp.concatenate([be1, be3]).reshape(1, Cout).astype(jnp.float32)
    return wsq_k, bsq_k, wexp_k, bexp_k


def fire_forward_nhwc(x_nhwc, wsq_k, bsq_k, wexp_k, bexp_k, *,
                      out_dtype=None, block_h=None):
    """Fused Fire forward on NHWC activations with pre-packed weights (fast
    path: no layout transposes, no per-call weight packing).  Output NHWC,
    channels = [expand1x1 ; expand3x3]."""
    B, H, W, Cin = x_nhwc.shape
    Csq = wsq_k.shape[1]
    Cout = wexp_k.shape[1]
    assert wsq_k.shape[0] == Cin and wexp_k.shape[0] == 9 * Csq
    compute_dtype = wsq_k.dtype
    out_dtype = x_nhwc.dtype if out_dtype is None else out_dtype

    vmem_limit = _vmem_limit_bytes()
    th = (block_h if block_h is not None
          else _pick_block_h(H, W, Cin, Csq, Cout, x_nhwc.dtype, compute_dtype,
                             out_dtype, budget_bytes=vmem_limit // 2))
    th = max(1, min(int(th), H))
    n_h = pl.cdiv(H, th)

    # TODO(synk): fold the two 1-row halo specs into one (TH+2)-row window
    # (pl.Element / manual DMA), single-buffer the invariant weight specs, and
    # add a W-split grid axis so tiny late-stage maps load-balance v7x's 2 TCs.
    return pl.pallas_call(
        functools.partial(fire_kernel, img_h=H),
        out_shape=jax.ShapeDtypeStruct((B, H, W, Cout), out_dtype),
        grid=(B, n_h),
        in_specs=[
            # main tile
            pl.BlockSpec((1, th, W, Cin), lambda b, h: (b, h, 0, 0)),
            # 1-row halos (clamped at the image border; masked in-kernel)
            pl.BlockSpec((1, 1, W, Cin),
                         lambda b, h: (b, jnp.maximum(h * th - 1, 0), 0, 0)),
            pl.BlockSpec((1, 1, W, Cin),
                         lambda b, h: (b, jnp.minimum((h + 1) * th, H - 1), 0, 0)),
            # weights / biases (whole, VMEM-resident)
            pl.BlockSpec((Cin, Csq), lambda b, h: (0, 0)),
            pl.BlockSpec((1, Csq), lambda b, h: (0, 0)),
            pl.BlockSpec((9 * Csq, Cout), lambda b, h: (0, 0)),
            pl.BlockSpec((1, Cout), lambda b, h: (0, 0)),
        ],
        out_specs=pl.BlockSpec((1, th, W, Cout), lambda b, h: (b, h, 0, 0)),
        compiler_params=pltpu.CompilerParams(
            dimension_semantics=("parallel", "parallel"),
            vmem_limit_bytes=vmem_limit),
    )(x_nhwc, x_nhwc, x_nhwc, wsq_k, bsq_k, wexp_k, bexp_k)


def fire_forward(x_nchw, wsq, bsq, we1, be1, we3, be3, *,
                 compute_dtype=jnp.bfloat16, out_dtype=None, block_h=None):
    """Fire forward with the PyTorch module's NCHW / Conv2d conventions.

    wsq: (Csq, Cin, 1, 1), we1: (Ce1, Csq, 1, 1), we3: (Ce3, Csq, 3, 3).
    Returns NCHW with channels = [expand1x1 ; expand3x3] (torch.cat dim=1).
    NOTE: this wrapper transposes and re-packs per call only for drop-in
    parity; in a full network keep activations NHWC end-to-end and call
    pack_fire_params once at init + fire_forward_nhwc per step.
    """
    out_dtype = x_nchw.dtype if out_dtype is None else out_dtype
    packed = pack_fire_params(wsq, bsq, we1, be1, we3, be3,
                              compute_dtype=compute_dtype)
    x = jnp.transpose(x_nchw, (0, 2, 3, 1)).astype(compute_dtype)
    y = fire_forward_nhwc(x, *packed, out_dtype=out_dtype, block_h=block_h)
    return jnp.transpose(y, (0, 3, 1, 2))


def fire_reference(x, wsq, bsq, we1, be1, we3, be3):
    """Pure-JAX reference (mirrors the PyTorch module) for validation."""
    dn = ("NCHW", "OIHW", "NCHW")
    s = jax.lax.conv_general_dilated(x, wsq, (1, 1), "VALID",
                                     dimension_numbers=dn)
    s = jnp.maximum(s + bsq[None, :, None, None], 0.0)
    a = jax.lax.conv_general_dilated(s, we1, (1, 1), "VALID",
                                     dimension_numbers=dn)
    a = jnp.maximum(a + be1[None, :, None, None], 0.0)
    b = jax.lax.conv_general_dilated(s, we3, (1, 1), ((1, 1), (1, 1)),
                                     dimension_numbers=dn)
    b = jnp.maximum(b + be3[None, :, None, None], 0.0)
    return jnp.concatenate([a, b], axis=1)


if __name__ == "__main__":
    key = jax.random.PRNGKey(0)
    B, Cin, H, W = 2, 4, 16, 16
    Csq, Ce1, Ce3 = 4, 8, 8
    ks = jax.random.split(key, 7)

    def u(k, shape, fan_in):
        bound = float(fan_in) ** -0.5
        return jax.random.uniform(k, shape, jnp.float32, -bound, bound)

    # Deterministic, PyTorch-shaped parameters.
    wsq = u(ks[0], (Csq, Cin, 1, 1), Cin)
    bsq = u(ks[1], (Csq,), Cin)
    we1 = u(ks[2], (Ce1, Csq, 1, 1), Csq)
    be1 = u(ks[3], (Ce1,), Csq)
    we3 = u(ks[4], (Ce3, Csq, 3, 3), Csq * 9)
    be3 = u(ks[5], (Ce3,), Csq * 9)
    x = jax.random.normal(ks[6], (B, Cin, H, W), jnp.float32)

    ref = fire_reference(x, wsq, bsq, we1, be1, we3, be3)

    # 1) f32 path, two even H-tiles (checks halo handling across tiles).
    run_f32 = jax.jit(functools.partial(fire_forward,
                                        compute_dtype=jnp.float32, block_h=8))
    out = jax.block_until_ready(run_f32(x, wsq, bsq, we1, be1, we3, be3))
    assert out.shape == (B, Ce1 + Ce3, H, W), out.shape
    assert jnp.allclose(out, ref, atol=1e-4, rtol=1e-4), "f32 (block_h=8) mismatch"

    # 2) f32 path, ragged tiling (16 = 6+6+4): checks the masked last tile.
    run_rag = jax.jit(functools.partial(fire_forward,
                                        compute_dtype=jnp.float32, block_h=6))
    out = jax.block_until_ready(run_rag(x, wsq, bsq, we1, be1, we3, be3))
    assert jnp.allclose(out, ref, atol=1e-4, rtol=1e-4), "f32 (ragged) mismatch"

    # 3) bf16 fast path: NHWC activations + one-time packed weights, auto tile,
    #    bf16 output (f32 accumulation inside; looser tolerance).
    packed = pack_fire_params(wsq, bsq, we1, be1, we3, be3,
                              compute_dtype=jnp.bfloat16)
    x_nhwc = jnp.transpose(x, (0, 2, 3, 1)).astype(jnp.bfloat16)
    run_bf16 = jax.jit(fire_forward_nhwc)
    out_nhwc = jax.block_until_ready(run_bf16(x_nhwc, *packed))
    out_bf16 = jnp.transpose(out_nhwc, (0, 3, 1, 2)).astype(jnp.float32)
    assert out_bf16.shape == (B, Ce1 + Ce3, H, W), out_bf16.shape
    assert jnp.allclose(out_bf16, ref, atol=3e-2, rtol=3e-2), "bf16 mismatch"

    print("KERNEL_OK")
</pallas_src>

<mosaic_0001>
module attributes {stable_mosaic.version = 11 : i64} {
  func.func @fire_kernel(%arg0: i32, %arg1: i32, %arg2: memref<1x8x16x4xf32, #tpu.memory_space<vmem>>, %arg3: memref<1x1x16x4xf32, #tpu.memory_space<vmem>>, %arg4: memref<1x1x16x4xf32, #tpu.memory_space<vmem>>, %arg5: memref<4x4xf32, #tpu.memory_space<vmem>>, %arg6: memref<1x4xf32, #tpu.memory_space<vmem>>, %arg7: memref<36x16xf32, #tpu.memory_space<vmem>>, %arg8: memref<1x16xf32, #tpu.memory_space<vmem>>, %arg9: memref<1x8x16x16xf32, #tpu.memory_space<vmem>>) attributes {dimension_semantics = [#tpu.dimension_semantics<parallel>, #tpu.dimension_semantics<parallel>], iteration_bounds = array<i64: 2, 2>, scalar_prefetch = 0 : i64, scratch_operands = 0 : i64, tpu.core_type = #tpu.core_type<tc>, window_params = [{transform_indices = @transform_0, window_bounds = array<i64: 1, 8, 16, 4>}, {transform_indices = @transform_1, window_bounds = array<i64: 1, 1, 16, 4>}, {transform_indices = @transform_2, window_bounds = array<i64: 1, 1, 16, 4>}, {pipeline_mode = #tpu.pipeline_mode<synchronous>, transform_indices = @transform_3, window_bounds = array<i64: 4, 4>}, {pipeline_mode = #tpu.pipeline_mode<synchronous>, transform_indices = @transform_4, window_bounds = array<i64: 1, 4>}, {pipeline_mode = #tpu.pipeline_mode<synchronous>, transform_indices = @transform_5, window_bounds = array<i64: 36, 16>}, {pipeline_mode = #tpu.pipeline_mode<synchronous>, transform_indices = @transform_6, window_bounds = array<i64: 1, 16>}, {transform_indices = @transform_7, window_bounds = array<i64: 1, 8, 16, 16>}]} {
    %c0 = arith.constant 0 : index
    %c0_0 = arith.constant 0 : index
    %c0_1 = arith.constant 0 : index
    %c0_2 = arith.constant 0 : index
    %0 = vector.load %arg2[%c0, %c0_0, %c0_1, %c0_2] : memref<1x8x16x4xf32, #tpu.memory_space<vmem>>, vector<1x8x16x4xf32>
    %1 = vector.shape_cast %0 : vector<1x8x16x4xf32> to vector<8x16x4xf32>
    %2 = vector.shape_cast %1 : vector<8x16x4xf32> to vector<128x4xf32>
    %c0_3 = arith.constant 0 : index
    %c0_4 = arith.constant 0 : index
    %3 = vector.load %arg5[%c0_3, %c0_4] : memref<4x4xf32, #tpu.memory_space<vmem>>, vector<4x4xf32>
    %cst = arith.constant dense<0.000000e+00> : vector<128x4xf32>
    %4 = tpu.matmul %2, %3, %cst {dimension_numbers = #tpu.dot_dimension_numbers<[1], [0], [0], [1], [0, 0, 1, 1], [], []>} : vector<128x4xf32>, vector<4x4xf32>, vector<128x4xf32> -> vector<128x4xf32>
    %c0_5 = arith.constant 0 : index
    %c0_6 = arith.constant 0 : index
    %c0_7 = arith.constant 0 : index
    %c0_8 = arith.constant 0 : index
    %5 = vector.load %arg3[%c0_5, %c0_6, %c0_7, %c0_8] : memref<1x1x16x4xf32, #tpu.memory_space<vmem>>, vector<1x1x16x4xf32>
    %6 = vector.shape_cast %5 : vector<1x1x16x4xf32> to vector<1x16x4xf32>
    %c0_9 = arith.constant 0 : index
    %c0_10 = arith.constant 0 : index
    %c0_11 = arith.constant 0 : index
    %c0_12 = arith.constant 0 : index
    %7 = vector.load %arg4[%c0_9, %c0_10, %c0_11, %c0_12] : memref<1x1x16x4xf32, #tpu.memory_space<vmem>>, vector<1x1x16x4xf32>
    %8 = vector.shape_cast %7 : vector<1x1x16x4xf32> to vector<1x16x4xf32>
    %9 = tpu.concatenate %6, %8 in 0 : vector<1x16x4xf32>, vector<1x16x4xf32> -> vector<2x16x4xf32>
    %10 = vector.shape_cast %9 : vector<2x16x4xf32> to vector<32x4xf32>
    %c0_13 = arith.constant 0 : index
    %c0_14 = arith.constant 0 : index
    %11 = vector.load %arg5[%c0_13, %c0_14] : memref<4x4xf32, #tpu.memory_space<vmem>>, vector<4x4xf32>
    %cst_15 = arith.constant dense<0.000000e+00> : vector<32x4xf32>
    %12 = tpu.matmul %10, %11, %cst_15 {dimension_numbers = #tpu.dot_dimension_numbers<[1], [0], [0], [1], [0, 0, 1, 1], [], []>} : vector<32x4xf32>, vector<4x4xf32>, vector<32x4xf32> -> vector<32x4xf32>
    %c0_16 = arith.constant 0 : index
    %c0_17 = arith.constant 0 : index
    %13 = vector.load %arg6[%c0_16, %c0_17] : memref<1x4xf32, #tpu.memory_space<vmem>>, vector<1x4xf32>
    %14 = vector.broadcast %13 : vector<1x4xf32> to vector<128x4xf32>
    %15 = arith.addf %4, %14 : vector<128x4xf32>
    %cst_18 = arith.constant 0.000000e+00 : f32
    %16 = vector.broadcast %cst_18 : f32 to vector<128x4xf32>
    %17 = arith.maximumf %15, %16 : vector<128x4xf32>
    %18 = vector.shape_cast %17 : vector<128x4xf32> to vector<8x16x4xf32>
    %19 = vector.broadcast %13 : vector<1x4xf32> to vector<32x4xf32>
    %20 = arith.addf %12, %19 : vector<32x4xf32>
    %cst_19 = arith.constant 0.000000e+00 : f32
    %21 = vector.broadcast %cst_19 : f32 to vector<32x4xf32>
    %22 = arith.maximumf %20, %21 : vector<32x4xf32>
    %23 = vector.shape_cast %22 : vector<32x4xf32> to vector<2x16x4xf32>
    %24 = vector.extract_strided_slice %23 {offsets = [0, 0, 0], sizes = [1, 16, 4], strides = [1, 1, 1]} : vector<2x16x4xf32> to vector<1x16x4xf32>
    %25 = vector.extract_strided_slice %23 {offsets = [1, 0, 0], sizes = [1, 16, 4], strides = [1, 1, 1]} : vector<2x16x4xf32> to vector<1x16x4xf32>
    %26 = tpu.concatenate %24, %18, %25 in 0 : vector<1x16x4xf32>, vector<8x16x4xf32>, vector<1x16x4xf32> -> vector<10x16x4xf32>
    %c8_i32 = arith.constant 8 : i32
    %27 = arith.muli %arg1, %c8_i32 : i32
    %c1_i32 = arith.constant 1 : i32
    %28 = arith.subi %27, %c1_i32 : i32
    %29 = tpu.iota {dimensions = array<i32: 0>} : vector<10x1x1xi32>
    %30 = vector.broadcast %28 : i32 to vector<10x1x1xi32>
    %31 = arith.addi %30, %29 : vector<10x1x1xi32>
    %c0_i32 = arith.constant 0 : i32
    %32 = vector.broadcast %c0_i32 : i32 to vector<10x1x1xi32>
    %33 = arith.cmpi sge, %31, %32 : vector<10x1x1xi32>
    %c16_i32 = arith.constant 16 : i32
    %34 = vector.broadcast %c16_i32 : i32 to vector<10x1x1xi32>
    %35 = arith.cmpi slt, %31, %34 : vector<10x1x1xi32>
    %36 = arith.andi %33, %35 : vector<10x1x1xi1>
    %cst_20 = arith.constant 0.000000e+00 : f32
    %37 = vector.shape_cast %36 : vector<10x1x1xi1> to vector<10x1x1xi1>
    %38 = vector.broadcast %37 : vector<10x1x1xi1> to vector<10x16x4xi1>
    %39 = vector.broadcast %cst_20 : f32 to vector<10x16x4xf32>
    %40 = arith.select %38, %26, %39 : vector<10x16x4xi1>, vector<10x16x4xf32>
    %cst_21 = arith.constant 0.000000e+00 : f32
    %41 = vector.broadcast %cst_21 : f32 to vector<10x1x4xf32>
    %42 = vector.extract_strided_slice %40 {offsets = [0, 0, 0], sizes = [10, 15, 4], strides = [1, 1, 1]} : vector<10x16x4xf32> to vector<10x15x4xf32>
    %43 = tpu.concatenate %41, %42 in 1 : vector<10x1x4xf32>, vector<10x15x4xf32> -> vector<10x16x4xf32>
    %44 = vector.extract_strided_slice %40 {offsets = [0, 1, 0], sizes = [10, 15, 4], strides = [1, 1, 1]} : vector<10x16x4xf32> to vector<10x15x4xf32>
    %45 = tpu.concatenate %44, %41 in 1 : vector<10x15x4xf32>, vector<10x1x4xf32> -> vector<10x16x4xf32>
    %46 = vector.extract_strided_slice %43 {offsets = [0, 0, 0], sizes = [8, 16, 4], strides = [1, 1, 1]} : vector<10x16x4xf32> to vector<8x16x4xf32>
    %47 = vector.extract_strided_slice %43 {offsets = [1, 0, 0], sizes = [8, 16, 4], strides = [1, 1, 1]} : vector<10x16x4xf32> to vector<8x16x4xf32>
    %48 = vector.extract_strided_slice %43 {offsets = [2, 0, 0], sizes = [8, 16, 4], strides = [1, 1, 1]} : vector<10x16x4xf32> to vector<8x16x4xf32>
    %49 = vector.extract_strided_slice %40 {offsets = [0, 0, 0], sizes = [8, 16, 4], strides = [1, 1, 1]} : vector<10x16x4xf32> to vector<8x16x4xf32>
    %50 = vector.extract_strided_slice %40 {offsets = [1, 0, 0], sizes = [8, 16, 4], strides = [1, 1, 1]} : vector<10x16x4xf32> to vector<8x16x4xf32>
    %51 = vector.extract_strided_slice %40 {offsets = [2, 0, 0], sizes = [8, 16, 4], strides = [1, 1, 1]} : vector<10x16x4xf32> to vector<8x16x4xf32>
    %52 = vector.extract_strided_slice %45 {offsets = [0, 0, 0], sizes = [8, 16, 4], strides = [1, 1, 1]} : vector<10x16x4xf32> to vector<8x16x4xf32>
    %53 = vector.extract_strided_slice %45 {offsets = [1, 0, 0], sizes = [8, 16, 4], strides = [1, 1, 1]} : vector<10x16x4xf32> to vector<8x16x4xf32>
    %54 = vector.extract_strided_slice %45 {offsets = [2, 0, 0], sizes = [8, 16, 4], strides = [1, 1, 1]} : vector<10x16x4xf32> to vector<8x16x4xf32>
    %55 = tpu.concatenate %46, %47, %48, %49, %50, %51, %52, %53, %54 in 2 : vector<8x16x4xf32>, vector<8x16x4xf32>, vector<8x16x4xf32>, vector<8x16x4xf32>, vector<8x16x4xf32>, vector<8x16x4xf32>, vector<8x16x4xf32>, vector<8x16x4xf32>, vector<8x16x4xf32> -> vector<8x16x36xf32>
    %56 = vector.shape_cast %55 : vector<8x16x36xf32> to vector<128x36xf32>
    %c0_22 = arith.constant 0 : index
    %c0_23 = arith.constant 0 : index
    %57 = vector.load %arg7[%c0_22, %c0_23] : memref<36x16xf32, #tpu.memory_space<vmem>>, vector<36x16xf32>
    %cst_24 = arith.constant dense<0.000000e+00> : vector<128x16xf32>
    %58 = tpu.matmul %56, %57, %cst_24 {dimension_numbers = #tpu.dot_dimension_numbers<[1], [0], [0], [1], [0, 0, 1, 1], [], []>} : vector<128x36xf32>, vector<36x16xf32>, vector<128x16xf32> -> vector<128x16xf32>
    %c0_25 = arith.constant 0 : index
    %c0_26 = arith.constant 0 : index
    %59 = vector.load %arg8[%c0_25, %c0_26] : memref<1x16xf32, #tpu.memory_space<vmem>>, vector<1x16xf32>
    %60 = vector.broadcast %59 : vector<1x16xf32> to vector<128x16xf32>
    %61 = arith.addf %58, %60 : vector<128x16xf32>
    %cst_27 = arith.constant 0.000000e+00 : f32
    %62 = vector.broadcast %cst_27 : f32 to vector<128x16xf32>
    %63 = arith.maximumf %61, %62 : vector<128x16xf32>
    %64 = vector.shape_cast %63 : vector<128x16xf32> to vector<8x16x16xf32>
    %c0_28 = arith.constant 0 : index
    %c0_29 = arith.constant 0 : index
    %c0_30 = arith.constant 0 : index
    %c0_31 = arith.constant 0 : index
    %65 = vector.load %arg9[%c0_28, %c0_29, %c0_30, %c0_31] : memref<1x8x16x16xf32, #tpu.memory_space<vmem>>, vector<1x8x16x16xf32>
    %66 = vector.shape_cast %65 : vector<1x8x16x16xf32> to vector<8x16x16xf32>
    %67 = vector.shape_cast %64 : vector<8x16x16xf32> to vector<1x8x16x16xf32>
    tpu.vector_store %arg9[%c0_28, %c0_29, %c0_30, %c0_31], %67 {strides = array<i32>} : memref<1x8x16x16xf32, #tpu.memory_space<vmem>>, vector<1x8x16x16xf32>,
    return
  }
  func.func @transform_0(%arg0: i32, %arg1: i32) -> (i32, i32, i32, i32) {
    %c0_i32 = arith.constant 0 : i32
    %c0_i32_0 = arith.constant 0 : i32
    %c0_i32_1 = arith.constant 0 : i32
    return %arg0, %arg1, %c0_i32, %c0_i32_0 : i32, i32, i32, i32
  }
  func.func @transform_1(%arg0: i32, %arg1: i32) -> (i32, i32, i32, i32) {
    %c8_i32 = arith.constant 8 : i32
    %0 = arith.muli %arg1, %c8_i32 : i32
    %c1_i32 = arith.constant 1 : i32
    %1 = arith.subi %0, %c1_i32 : i32
    %c0_i32 = arith.constant 0 : i32
    %2 = arith.maxsi %1, %c0_i32 : i32
    %c0_i32_0 = arith.constant 0 : i32
    %c0_i32_1 = arith.constant 0 : i32
    %c0_i32_2 = arith.constant 0 : i32
    return %arg0, %2, %c0_i32_0, %c0_i32_1 : i32, i32, i32, i32
  }
  func.func @transform_2(%arg0: i32, %arg1: i32) -> (i32, i32, i32, i32) {
    %c1_i32 = arith.constant 1 : i32
    %0 = arith.addi %arg1, %c1_i32 : i32
    %c8_i32 = arith.constant 8 : i32
    %1 = arith.muli %0, %c8_i32 : i32
    %c15_i32 = arith.constant 15 : i32
    %2 = arith.minsi %1, %c15_i32 : i32
    %c0_i32 = arith.constant 0 : i32
    %c0_i32_0 = arith.constant 0 : i32
    %c0_i32_1 = arith.constant 0 : i32
    return %arg0, %2, %c0_i32, %c0_i32_0 : i32, i32, i32, i32
  }
  func.func @transform_3(%arg0: i32, %arg1: i32) -> (i32, i32) {
    %c0_i32 = arith.constant 0 : i32
    %c0_i32_0 = arith.constant 0 : i32
    %c0_i32_1 = arith.constant 0 : i32
    return %c0_i32, %c0_i32_0 : i32, i32
  }
  func.func @transform_4(%arg0: i32, %arg1: i32) -> (i32, i32) {
    %c0_i32 = arith.constant 0 : i32
    %c0_i32_0 = arith.constant 0 : i32
    %c0_i32_1 = arith.constant 0 : i32
    return %c0_i32, %c0_i32_0 : i32, i32
  }
  func.func @transform_5(%arg0: i32, %arg1: i32) -> (i32, i32) {
    %c0_i32 = arith.constant 0 : i32
    %c0_i32_0 = arith.constant 0 : i32
    %c0_i32_1 = arith.constant 0 : i32
    return %c0_i32, %c0_i32_0 : i32, i32
  }
  func.func @transform_6(%arg0: i32, %arg1: i32) -> (i32, i32) {
    %c0_i32 = arith.constant 0 : i32
    %c0_i32_0 = arith.constant 0 : i32
    %c0_i32_1 = arith.constant 0 : i32
    return %c0_i32, %c0_i32_0 : i32, i32
  }
  func.func @transform_7(%arg0: i32, %arg1: i32) -> (i32, i32, i32, i32) {
    %c0_i32 = arith.constant 0 : i32
    %c0_i32_0 = arith.constant 0 : i32
    %c0_i32_1 = arith.constant 0 : i32
    return %arg0, %arg1, %c0_i32, %c0_i32_0 : i32, i32, i32, i32
  }
}

</mosaic_0001>

<llo_original>
// kernel: fire_forward.1
$region0: #{fire_forward.1}
  #allocation0 [shape = 'u32[]', space=smem, size = 0x4, offset = 0x4, fixed_abs, tag = 'smem constant byte address 0x4 - core index']
  #allocation1 [shape = 'u32[144,128]{1,0:T(1,128)}', space=vmem, size = 0x12000, scoped, tag = 'internal scratch']
  %s0 = inlined_call_operand.hbm [shape: f32[2,16,16,4], index: 0, kind: input, shape index: {}, may-alias: {0,1,2}]
  %s1 = inlined_call_operand.hbm [shape: f32[2,16,16,4], index: 1, kind: input, shape index: {}, may-alias: {0,1,2}]
  %s2 = inlined_call_operand.hbm [shape: f32[2,16,16,4], index: 2, kind: input, shape index: {}, may-alias: {0,1,2}]
  %s3 = inlined_call_operand.hbm [shape: f32[4,4], index: 3, kind: input, shape index: {}]
  %s4 = inlined_call_operand.hbm [shape: f32[1,4], index: 4, kind: input, shape index: {}]
  %s5 = inlined_call_operand.hbm [shape: f32[36,16], index: 5, kind: input, shape index: {}]
  %s6 = inlined_call_operand.hbm [shape: f32[1,16], index: 6, kind: input, shape index: {}]
  %s7 = inlined_call_operand.hbm [shape: f32[2,16,16,16], index: 7, kind: output, shape index: {}]
  %s8 = sld [smem:[#allocation0]]
  $region89: #{fire_forward.1} parent=0
    _
  %s10 = ssub.s32 1, %s8
  %s11 = scalar_select 0, %s10, %s8
  $region1: #{fire_forward.1} parent=0
    #allocation2 [shape = 'u8[131072]{0}', space=vmem, size = 0x20000, scoped, tag = 'input window, operand 0']
    #allocation3 [shape = 's32[2]{0}', space=sflag, size = 0x8, scoped, tag = 'scoped memory for fire_forward.1']
    #allocation4 [shape = 's32[2]{0}', space=sflag, size = 0x8, scoped, tag = 'scoped memory for fire_forward.1']
    #allocation5 [shape = 'u8[16384]{0}', space=vmem, size = 0x4000, scoped, tag = 'input window, operand 1']
    #allocation6 [shape = 's32[2]{0}', space=sflag, size = 0x8, scoped, tag = 'scoped memory for fire_forward.1']
    #allocation7 [shape = 'u8[16384]{0}', space=vmem, size = 0x4000, scoped, tag = 'input window, operand 2']
    #allocation8 [shape = 'u8[2048]{0}', space=vmem, size = 0x800, scoped, tag = 'input window, operand 3, single buffered']
    #allocation9 [shape = 's32[1]{0}', space=sflag, size = 0x4, scoped, tag = 'scoped memory for fire_forward.1']
    #allocation10 [shape = 'u8[512]{0}', space=vmem, size = 0x400, scoped, tag = 'input window, operand 4, single buffered']
    #allocation11 [shape = 'u8[20480]{0}', space=vmem, size = 0x5000, scoped, tag = 'input window, operand 5, single buffered']
    #allocation12 [shape = 's32[1]{0}', space=sflag, size = 0x4, scoped, tag = 'scoped memory for fire_forward.1']
    #allocation13 [shape = 'u8[512]{0}', space=vmem, size = 0x400, scoped, tag = 'input window, operand 6, single buffered']
    #allocation14 [shape = 'u8[131072]{0}', space=vmem, size = 0x20000, scoped, tag = 'output window, operand 0']
    %12 = vsyncpa [#allocation3], 0
    %s13 = scalar_lea.sflag [#allocation3], 1
    %14 = vsyncpa %s13, 0
    %15 = vsyncpa [#allocation6], 0
    %s16 = scalar_lea.sflag [#allocation6], 1
    %17 = vsyncpa %s16, 0
    %18 = vsyncpa [#allocation9], 0
    %19 = vsyncpa [#allocation12], 0
    %20 = vsyncpa [#allocation4], 0
    %s21 = scalar_lea.sflag [#allocation4], 1
    %22 = vsyncpa %s21, 0
    loop: start=0, step=1, limit=6
    $region2: #{fire_forward.1} parent=1 // loop_pre_header
      _
    $region3: #{fire_forward.1} parent=1 // loop_header
      %s24 = sphi 0, %s28
      %p25 = scmp.ge.s32.totalorder %s24, 6
      %s31 = sphi 0, %s43
      %s32 = sphi 0, %s39
      %s33 = sphi 0, %s31
      %s34 = sphi 0, %s32
      %s35 = sphi 0, %s33
      %s36 = sphi 0, %s34
      %s48 = sphi 0, %s50
      %s51 = sphi 0, %s48
      %s52 = sphi 0, %s51
      %s68 = sphi 0, %s52
      %s84 = sphi 0, %s86
      %s87 = sphi 0, %s84
      %s88 = sphi 0, %s87
      %s104 = sphi 0, %s88
      %s120 = sphi 0, %s122
      %s123 = sphi 0, %s120
      %s124 = sphi 0, %s123
      %s140 = sphi 0, %s124
      %s144 = sphi 0, %s144
      %s146 = sphi 0, %s144
      %s147 = sphi 0, %s146
      %s161 = sphi 0, %s147
      %s165 = sphi 0, %s165
      %s167 = sphi 0, %s165
      %s168 = sphi 0, %s167
      %s182 = sphi 0, %s168
      %s186 = sphi 0, %s186
      %s188 = sphi 0, %s186
      %s189 = sphi 0, %s188
      %s203 = sphi 0, %s189
      %s207 = sphi 0, %s207
      %s209 = sphi 0, %s207
      %s210 = sphi 0, %s209
      %s224 = sphi 0, %s210
      %s232 = sphi 0, %s234
      %s235 = sphi 0, %s232
      %s236 = sphi 0, %s235
      %s252 = sphi 0, %s236
    $region4: #{fire_forward.1} parent=1 // loop_header_branch
      %27 = sbr.rel (%p25) target = $region8
    $region5: #{fire_forward.1} parent=1 // loop_body
      %s29 = ssub.s32 %s24, 1
      %s30 = ssub.s32 %s24, 2
      %s37 = sadd.s32 1, %s32
      %p38 = scmp.ge.s32.totalorder %s37, 2
      %s39 = scalar_select %p38, 0, %s37
      %s40 = sadd.s32 1, %s31
      %s41 = scalar_select %p38, %s40, %s31
      %p42 = scmp.ge.s32.totalorder %s41, 2
      %s43 = scalar_select %p42, 0, %s41
      %s44 = ssub.s32 %s31, %s43
      %s45 = ssub.s32 %s32, %s39
      %s46 = sor.u32 %s44, %s45
      %p47 = scmp.eq.s32.totalorder %s46, 0
      %s49 = sadd.s32 %s48, 1
      %s50 = scalar_select %p47, %s48, %s49
      %p53 = pneg %p47
      %p54 = scmp.eq.s32.totalorder %s24, 3
      %p55 = por %p53, %p54
      %p56 = scmp.ne.s32.totalorder %s48, %s51
      %p57 = scmp.eq.s32.totalorder %s24, 0
      %p58 = por %p56, %p57
      %p59 = scmp.ne.s32.totalorder %s48, %s51
      %p60 = scmp.eq.s32.totalorder %s29, 3
      %p61 = por %p59, %p60
      %p62 = scmp.ne.s32.totalorder %s51, %s52
      %p63 = scmp.eq.s32.totalorder %s29, 0
      %p64 = por %p62, %p63
      %p65 = scmp.ne.s32.totalorder %s51, %s52
      %p66 = scmp.eq.s32.totalorder %s30, 3
      %p67 = por %p65, %p66
      %p69 = scmp.ne.s32.totalorder %s52, %s68
      %p70 = scmp.eq.s32.totalorder %s30, 0
      %p71 = por %p69, %p70
      %s72 = smul.u32 %s32, 8
      %s73 = ssub.s32 %s72, 1
      %p74 = scmp.gt.s32.totalorder %s73, 0
      %s75 = scalar_select %p74, %s73, 0
      %s76 = smul.u32 %s39, 8
      %s77 = ssub.s32 %s76, 1
      %p78 = scmp.gt.s32.totalorder %s77, 0
      %s79 = scalar_select %p78, %s77, 0
      %s80 = ssub.s32 %s31, %s43
      %s81 = ssub.s32 %s75, %s79
      %s82 = sor.u32 %s80, %s81
      %p83 = scmp.eq.s32.totalorder %s82, 0
      %s85 = sadd.s32 %s84, 1
      %s86 = scalar_select %p83, %s84, %s85
      %p89 = pneg %p83
      %p90 = scmp.eq.s32.totalorder %s24, 3
      %p91 = por %p89, %p90
      %p92 = scmp.ne.s32.totalorder %s84, %s87
      %p93 = scmp.eq.s32.totalorder %s24, 0
      %p94 = por %p92, %p93
      %p95 = scmp.ne.s32.totalorder %s84, %s87
      %p96 = scmp.eq.s32.totalorder %s29, 3
      %p97 = por %p95, %p96
      %p98 = scmp.ne.s32.totalorder %s87, %s88
      %p99 = scmp.eq.s32.totalorder %s29, 0
      %p100 = por %p98, %p99
      %p101 = scmp.ne.s32.totalorder %s87, %s88
      %p102 = scmp.eq.s32.totalorder %s30, 3
      %p103 = por %p101, %p102
      %p105 = scmp.ne.s32.totalorder %s88, %s104
      %p106 = scmp.eq.s32.totalorder %s30, 0
      %p107 = por %p105, %p106
      %s108 = sadd.s32 %s32, 1
      %s109 = smul.u32 %s108, 8
      %p110 = scmp.lt.s32.totalorder %s109, 15
      %s111 = scalar_select %p110, %s109, 15
      %s112 = sadd.s32 %s39, 1
      %s113 = smul.u32 %s112, 8
      %p114 = scmp.lt.s32.totalorder %s113, 15
      %s115 = scalar_select %p114, %s113, 15
      %s116 = ssub.s32 %s31, %s43
      %s117 = ssub.s32 %s111, %s115
      %s118 = sor.u32 %s116, %s117
      %p119 = scmp.eq.s32.totalorder %s118, 0
      %s121 = sadd.s32 %s120, 1
      %s122 = scalar_select %p119, %s120, %s121
      %p125 = pneg %p119
      %p126 = scmp.eq.s32.totalorder %s24, 3
      %p127 = por %p125, %p126
      %p128 = scmp.ne.s32.totalorder %s120, %s123
      %p129 = scmp.eq.s32.totalorder %s24, 0
      %p130 = por %p128, %p129
      %p131 = scmp.ne.s32.totalorder %s120, %s123
      %p132 = scmp.eq.s32.totalorder %s29, 3
      %p133 = por %p131, %p132
      %p134 = scmp.ne.s32.totalorder %s123, %s124
      %p135 = scmp.eq.s32.totalorder %s29, 0
      %p136 = por %p134, %p135
      %p137 = scmp.ne.s32.totalorder %s123, %s124
      %p138 = scmp.eq.s32.totalorder %s30, 3
      %p139 = por %p137, %p138
      %p141 = scmp.ne.s32.totalorder %s124, %s140
      %p142 = scmp.eq.s32.totalorder %s30, 0
      %p143 = por %p141, %p142
      %s145 = sadd.s32 %s144, 1
      %p148 = scmp.eq.s32.totalorder %s24, 3
      %p149 = scmp.ne.s32.totalorder %s144, %s146
      %p150 = scmp.eq.s32.totalorder %s24, 0
      %p151 = por %p149, %p150
      %p152 = scmp.ne.s32.totalorder %s144, %s146
      %p153 = scmp.eq.s32.totalorder %s29, 3
      %p154 = por %p152, %p153
      %p155 = scmp.ne.s32.totalorder %s146, %s147
      %p156 = scmp.eq.s32.totalorder %s29, 0
      %p157 = por %p155, %p156
      %p158 = scmp.ne.s32.totalorder %s146, %s147
      %p159 = scmp.eq.s32.totalorder %s30, 3
      %p160 = por %p158, %p159
      %p162 = scmp.ne.s32.totalorder %s147, %s161
      %p163 = scmp.eq.s32.totalorder %s30, 0
      %p164 = por %p162, %p163
      %s166 = sadd.s32 %s165, 1
      %p169 = scmp.eq.s32.totalorder %s24, 3
      %p170 = scmp.ne.s32.totalorder %s165, %s167
      %p171 = scmp.eq.s32.totalorder %s24, 0
      %p172 = por %p170, %p171
      %p173 = scmp.ne.s32.totalorder %s165, %s167
      %p174 = scmp.eq.s32.totalorder %s29, 3
      %p175 = por %p173, %p174
      %p176 = scmp.ne.s32.totalorder %s167, %s168
      %p177 = scmp.eq.s32.totalorder %s29, 0
      %p178 = por %p176, %p177
      %p179 = scmp.ne.s32.totalorder %s167, %s168
      %p180 = scmp.eq.s32.totalorder %s30, 3
      %p181 = por %p179, %p180
      %p183 = scmp.ne.s32.totalorder %s168, %s182
      %p184 = scmp.eq.s32.totalorder %s30, 0
      %p185 = por %p183, %p184
      %s187 = sadd.s32 %s186, 1
      %p190 = scmp.eq.s32.totalorder %s24, 3
      %p191 = scmp.ne.s32.totalorder %s186, %s188
      %p192 = scmp.eq.s32.totalorder %s24, 0
      %p193 = por %p191, %p192
      %p194 = scmp.ne.s32.totalorder %s186, %s188
      %p195 = scmp.eq.s32.totalorder %s29, 3
      %p196 = por %p194, %p195
      %p197 = scmp.ne.s32.totalorder %s188, %s189
      %p198 = scmp.eq.s32.totalorder %s29, 0
      %p199 = por %p197, %p198
      %p200 = scmp.ne.s32.totalorder %s188, %s189
      %p201 = scmp.eq.s32.totalorder %s30, 3
      %p202 = por %p200, %p201
      %p204 = scmp.ne.s32.totalorder %s189, %s203
      %p205 = scmp.eq.s32.totalorder %s30, 0
      %p206 = por %p204, %p205
      %s208 = sadd.s32 %s207, 1
      %p211 = scmp.eq.s32.totalorder %s24, 3
      %p212 = scmp.ne.s32.totalorder %s207, %s209
      %p213 = scmp.eq.s32.totalorder %s24, 0
      %p214 = por %p212, %p213
      %p215 = scmp.ne.s32.totalorder %s207, %s209
      %p216 = scmp.eq.s32.totalorder %s29, 3
      %p217 = por %p215, %p216
      %p218 = scmp.ne.s32.totalorder %s209, %s210
      %p219 = scmp.eq.s32.totalorder %s29, 0
      %p220 = por %p218, %p219
      %p221 = scmp.ne.s32.totalorder %s209, %s210
      %p222 = scmp.eq.s32.totalorder %s30, 3
      %p223 = por %p221, %p222
      %p225 = scmp.ne.s32.totalorder %s210, %s224
      %p226 = scmp.eq.s32.totalorder %s30, 0
      %p227 = por %p225, %p226
      %s228 = ssub.s32 %s31, %s43
      %s229 = ssub.s32 %s32, %s39
      %s230 = sor.u32 %s228, %s229
      %p231 = scmp.eq.s32.totalorder %s230, 0
      %s233 = sadd.s32 %s232, 1
      %s234 = scalar_select %p231, %s232, %s233
      %p237 = pneg %p231
      %p238 = scmp.eq.s32.totalorder %s24, 3
      %p239 = por %p237, %p238
      %p240 = scmp.ne.s32.totalorder %s232, %s235
      %p241 = scmp.eq.s32.totalorder %s24, 0
      %p242 = por %p240, %p241
      %p243 = scmp.ne.s32.totalorder %s232, %s235
      %p244 = scmp.eq.s32.totalorder %s29, 3
      %p245 = por %p243, %p244
      %p246 = scmp.ne.s32.totalorder %s235, %s236
      %p247 = scmp.eq.s32.totalorder %s29, 0
      %p248 = por %p246, %p247
      %p249 = scmp.ne.s32.totalorder %s235, %s236
      %p250 = scmp.eq.s32.totalorder %s30, 3
      %p251 = por %p249, %p250
      %p253 = scmp.ne.s32.totalorder %s236, %s252
      %p254 = scmp.eq.s32.totalorder %s30, 0
      %p255 = por %p253, %p254
      %p256 = scmp.le.s32.totalorder 1, %s24
      %p257 = scmp.lt.s32.totalorder %s24, 5
      %p258 = pnand %p256, %p257
      %p259 = pneg %p258
      // Predicated region
      $region9: #{fire_forward.1} parent=5 // pred_check
        _
      $region10: #{fire_forward.1} parent=5 // pred_check_branch
        %261 = sbr.rel (%p258) target = $region12
      $region11: #{fire_forward.1} parent=5 // pred_region
        %s262 = ssub.s32 %s24, 1
        // Predicated region
        $region13: #{fire_forward.1} parent=11 // pred_check
          %p263 = pneg %p157
        $region14: #{fire_forward.1} parent=11 // pred_check_branch
          %265 = sbr.rel (%p263) target = $region16
        $region15: #{fire_forward.1} parent=11 // pred_region
          %s267 = ssub.s32 64, 64
          %268 = vsyncadd [#allocation9], %s267
          %s270 = sshll.u32 [#allocation8], 4
          %s271 = int_to_ptr.vmem [resolvable:$true] %s270
          %273 = dma.hbm_to_vmem [thread:$0]  %s3, 64, %s271, [#allocation9]
        $region16: #{fire_forward.1} parent=11 // pred_fallthru
          _
        // Predicated region
        $region17: #{fire_forward.1} parent=11 // pred_check
          %p274 = pneg %p178
        $region18: #{fire_forward.1} parent=11 // pred_check_branch
          %276 = sbr.rel (%p274) target = $region20
        $region19: #{fire_forward.1} parent=11 // pred_region
          %s278 = ssub.s32 16, 16
          %279 = vsyncadd [#allocation9], %s278
          %s281 = sshll.u32 [#allocation10], 4
          %s282 = int_to_ptr.vmem [resolvable:$true] %s281
          %284 = dma.hbm_to_vmem [thread:$0]  %s4, 16, %s282, [#allocation9]
        $region20: #{fire_forward.1} parent=11 // pred_fallthru
          _
        // Predicated region
        $region21: #{fire_forward.1} parent=11 // pred_check
          %p285 = pneg %p199
        $region22: #{fire_forward.1} parent=11 // pred_check_branch
          %287 = sbr.rel (%p285) target = $region24
        $region23: #{fire_forward.1} parent=11 // pred_region
          %s289 = ssub.s32 640, 640
          %290 = vsyncadd [#allocation12], %s289
          %s291 = sshll.u32 [#allocation11], 4
          %s292 = int_to_ptr.vmem [resolvable:$true] %s291
          %297 = dma.hbm_to_vmem [thread:$0]  %s5, 640, %s292, [#allocation12], 128, 128, 8
        $region24: #{fire_forward.1} parent=11 // pred_fallthru
          _
        // Predicated region
        $region25: #{fire_forward.1} parent=11 // pred_check
          %p298 = pneg %p220
        $region26: #{fire_forward.1} parent=11 // pred_check_branch
          %300 = sbr.rel (%p298) target = $region28
        $region27: #{fire_forward.1} parent=11 // pred_region
          %s302 = ssub.s32 16, 16
          %303 = vsyncadd [#allocation12], %s302
          %s305 = sshll.u32 [#allocation13], 4
          %s306 = int_to_ptr.vmem [resolvable:$true] %s305
          %308 = dma.hbm_to_vmem [thread:$0]  %s6, 16, %s306, [#allocation12]
        $region28: #{fire_forward.1} parent=11 // pred_fallthru
          _
      $region12: #{fire_forward.1} parent=5 // pred_fallthru
        _
      %p309 = scmp.lt.s32.totalorder %s24, 4
      // Predicated region
      $region29: #{fire_forward.1} parent=5 // pred_check
        %p310 = pneg %p309
      $region30: #{fire_forward.1} parent=5 // pred_check_branch
        %312 = sbr.rel (%p310) target = $region32
      $region31: #{fire_forward.1} parent=5 // pred_region
        // Predicated region
        $region33: #{fire_forward.1} parent=31 // pred_check
          %p313 = pneg %p58
        $region34: #{fire_forward.1} parent=31 // pred_check_branch
          %315 = sbr.rel (%p313) target = $region36
        $region35: #{fire_forward.1} parent=31 // pred_region
          %s316 = sand.u32 %s48, 1
          %s317 = scalar_lea.sflag [#allocation3], %s316
          %s318 = sand.u32 %s48, 1
          %s319 = smul.addr %s318, 128
          %s320 = scalar_lea.vmem [#allocation2], %s319
          %s321 = smul.u32 8, %s32
          %s323 = ssub.s32 2048, 2048
          %324 = vsyncadd %s317, %s323
          %s325 = smul.addr %s321, 2
          %s326 = smul.addr %s31, 32
          %s327 = sadd.s32 %s325, %s326
          %s328 = smul.addr %s327, 128
          %s329 = scalar_lea.hbm %s0, %s328
          %s330 = sshll.u32 %s320, 4
          %s331 = int_to_ptr.vmem [resolvable:$true] %s330
          %336 = dma.hbm_to_vmem [thread:$0]  %s329, 2048, %s331, %s317, 128, 128, 8
        $region36: #{fire_forward.1} parent=31 // pred_fallthru
          _
        // Predicated region
        $region37: #{fire_forward.1} parent=31 // pred_check
          %p337 = pneg %p94
        $region38: #{fire_forward.1} parent=31 // pred_check_branch
          %339 = sbr.rel (%p337) target = $region40
        $region39: #{fire_forward.1} parent=31 // pred_region
          %s340 = sand.u32 %s24, 1
          %s341 = scalar_lea.sflag [#allocation6], %s340
          %s342 = sand.u32 %s84, 1
          %s343 = smul.addr %s342, 16
          %s344 = scalar_lea.vmem [#allocation5], %s343
          %s345 = smul.u32 %s32, 8
          %s346 = ssub.s32 %s345, 1
          %p347 = scmp.gt.s32.totalorder %s346, 0
          %s348 = scalar_select %p347, %s346, 0
          %s350 = ssub.s32 256, 256
          %351 = vsyncadd %s341, %s350
          %s352 = smul.addr %s348, 2
          %s353 = smul.addr %s31, 32
          %s354 = sadd.s32 %s352, %s353
          %s355 = smul.addr %s354, 128
          %s356 = scalar_lea.hbm %s1, %s355
          %s357 = sshll.u32 %s344, 4
          %s358 = int_to_ptr.vmem [resolvable:$true] %s357
          %363 = dma.hbm_to_vmem [thread:$0]  %s356, 256, %s358, %s341, 128, 128, 8
        $region40: #{fire_forward.1} parent=31 // pred_fallthru
          _
        // Predicated region
        $region41: #{fire_forward.1} parent=31 // pred_check
          %p364 = pneg %p130
        $region42: #{fire_forward.1} parent=31 // pred_check_branch
          %366 = sbr.rel (%p364) target = $region44
        $region43: #{fire_forward.1} parent=31 // pred_region
          %s367 = sand.u32 %s24, 1
          %s368 = scalar_lea.sflag [#allocation6], %s367
          %s369 = sand.u32 %s120, 1
          %s370 = smul.addr %s369, 16
          %s371 = scalar_lea.vmem [#allocation7], %s370
          %s372 = sadd.s32 %s32, 1
          %s373 = smul.u32 %s372, 8
          %p374 = scmp.lt.s32.totalorder %s373, 15
          %s375 = scalar_select %p374, %s373, 15
          %s377 = ssub.s32 256, 256
          %378 = vsyncadd %s368, %s377
          %s379 = smul.addr %s375, 2
          %s380 = smul.addr %s31, 32
          %s381 = sadd.s32 %s379, %s380
          %s382 = smul.addr %s381, 128
          %s383 = scalar_lea.hbm %s2, %s382
          %s384 = sshll.u32 %s371, 4
          %s385 = int_to_ptr.vmem [resolvable:$true] %s384
          %390 = dma.hbm_to_vmem [thread:$0]  %s383, 256, %s385, %s368, 128, 128, 8
        $region44: #{fire_forward.1} parent=31 // pred_fallthru
          _
      $region32: #{fire_forward.1} parent=5 // pred_fallthru
        _
      %p391 = scmp.le.s32.totalorder 1, %s24
      %p392 = scmp.lt.s32.totalorder %s24, 5
      %p393 = pnand %p391, %p392
      %p394 = pneg %p393
      // Predicated region
      $region45: #{fire_forward.1} parent=5 // pred_check
        _
      $region46: #{fire_forward.1} parent=5 // pred_check_branch
        %396 = sbr.rel (%p393) target = $region48
      $region47: #{fire_forward.1} parent=5 // pred_region
        %s397 = ssub.s32 %s24, 1
        %s398 = sand.u32 %s51, 1
        %s399 = scalar_lea.sflag [#allocation3], %s398
        %s400 = sand.u32 %s51, 1
        %s401 = smul.addr %s400, 128
        %s402 = scalar_lea.vmem [#allocation2], %s401
        // Predicated region
        $region49: #{fire_forward.1} parent=47 // pred_check
          %p403 = pneg %p64
        $region50: #{fire_forward.1} parent=47 // pred_check_branch
          %405 = sbr.rel (%p403) target = $region52
        $region51: #{fire_forward.1} parent=47 // pred_region
          %406 = dma.done %s399, 2048
        $region52: #{fire_forward.1} parent=47 // pred_fallthru
          _
        %s407 = sand.u32 %s29, 1
        %s408 = scalar_lea.sflag [#allocation6], %s407
        %s409 = sand.u32 %s87, 1
        %s410 = smul.addr %s409, 16
        %s411 = scalar_lea.vmem [#allocation5], %s410
        // Predicated region
        $region53: #{fire_forward.1} parent=47 // pred_check
          %p412 = pneg %p100
        $region54: #{fire_forward.1} parent=47 // pred_check_branch
          %414 = sbr.rel (%p412) target = $region56
        $region55: #{fire_forward.1} parent=47 // pred_region
          %415 = dma.done %s408, 256
        $region56: #{fire_forward.1} parent=47 // pred_fallthru
          _
        %s416 = sand.u32 %s29, 1
        %s417 = scalar_lea.sflag [#allocation6], %s416
        %s418 = sand.u32 %s123, 1
        %s419 = smul.addr %s418, 16
        %s420 = scalar_lea.vmem [#allocation7], %s419
        // Predicated region
        $region57: #{fire_forward.1} parent=47 // pred_check
          %p421 = pneg %p136
        $region58: #{fire_forward.1} parent=47 // pred_check_branch
          %423 = sbr.rel (%p421) target = $region60
        $region59: #{fire_forward.1} parent=47 // pred_region
          %424 = dma.done %s417, 256
        $region60: #{fire_forward.1} parent=47 // pred_fallthru
          _
        // Predicated region
        $region61: #{fire_forward.1} parent=47 // pred_check
          %p425 = pneg %p157
        $region62: #{fire_forward.1} parent=47 // pred_check_branch
          %427 = sbr.rel (%p425) target = $region64
        $region63: #{fire_forward.1} parent=47 // pred_region
          %428 = dma.done [#allocation9], 64
        $region64: #{fire_forward.1} parent=47 // pred_fallthru
          _
        // Predicated region
        $region65: #{fire_forward.1} parent=47 // pred_check
          %p429 = pneg %p178
        $region66: #{fire_forward.1} parent=47 // pred_check_branch
          %431 = sbr.rel (%p429) target = $region68
        $region67: #{fire_forward.1} parent=47 // pred_region
          %432 = dma.done [#allocation9], 16
        $region68: #{fire_forward.1} parent=47 // pred_fallthru
          _
        // Predicated region
        $region69: #{fire_forward.1} parent=47 // pred_check
          %p433 = pneg %p199
        $region70: #{fire_forward.1} parent=47 // pred_check_branch
          %435 = sbr.rel (%p433) target = $region72
        $region71: #{fire_forward.1} parent=47 // pred_region
          %436 = dma.done [#allocation12], 640
        $region72: #{fire_forward.1} parent=47 // pred_fallthru
          _
        // Predicated region
        $region73: #{fire_forward.1} parent=47 // pred_check
          %p437 = pneg %p220
        $region74: #{fire_forward.1} parent=47 // pred_check_branch
          %439 = sbr.rel (%p437) target = $region76
        $region75: #{fire_forward.1} parent=47 // pred_region
          %440 = dma.done [#allocation12], 16
        $region76: #{fire_forward.1} parent=47 // pred_fallthru
          _
        %s441 = sand.u32 %s51, 1
        %s442 = scalar_lea.sflag [#allocation3], %s441
        %s443 = sand.u32 %s51, 1
        %s444 = smul.addr %s443, 128
        %s445 = scalar_lea.vmem [#allocation2], %s444
        %p446 = pneg %p64
        %p447 = pneg %p61
        %s448 = sand.u32 %s29, 1
        %s449 = scalar_lea.sflag [#allocation6], %s448
        %s450 = sand.u32 %s87, 1
        %s451 = smul.addr %s450, 16
        %s452 = scalar_lea.vmem [#allocation5], %s451
        %p453 = pneg %p100
        %p454 = pneg %p97
        %s455 = sand.u32 %s29, 1
        %s456 = scalar_lea.sflag [#allocation6], %s455
        %s457 = sand.u32 %s123, 1
        %s458 = smul.addr %s457, 16
        %s459 = scalar_lea.vmem [#allocation7], %s458
        %p460 = pneg %p136
        %p461 = pneg %p133
        %p462 = pneg %p157
        %p463 = pneg %p154
        %p464 = pneg %p178
        %p465 = pneg %p175
        %p466 = pneg %p199
        %p467 = pneg %p196
        %p468 = pneg %p220
        %p469 = pneg %p217
        %p470 = pneg %p248
        %p471 = pneg %p245
        %s472 = sand.u32 %s235, 1
        %s473 = scalar_lea.sflag [#allocation4], %s472
        %s474 = sand.u32 %s235, 1
        %s475 = smul.addr %s474, 128
        %s476 = scalar_lea.vmem [#allocation14], %s475
        %s477 = smul.u32 8, %s34
        %s478 = smul.u32 %s34, 8
        %s479 = ssub.s32 %s478, 1
        %p480 = scmp.gt.s32.totalorder %s479, 0
        %s481 = scalar_select %p480, %s479, 0
        %s482 = sadd.s32 %s34, 1
        %s483 = smul.u32 %s482, 8
        %p484 = scmp.lt.s32.totalorder %s483, 15
        %s485 = scalar_select %p484, %s483, 15
        %s486 = smul.u32 8, %s34
        %v487 = vld [vmem:[%s402] sm:$0xff]
        %v488 = vld [vmem:[%s402 + $0x8] sm:$0xff]
        %v489 = vld [vmem:[%s402 + $0x10] sm:$0xff]
        %v490 = vld [vmem:[%s402 + $0x18] sm:$0xff]
        %v491 = vld [vmem:[%s402 + $0x20] sm:$0xff]
        %v492 = vld [vmem:[%s402 + $0x28] sm:$0xff]
        %v493 = vld [vmem:[%s402 + $0x30] sm:$0xff]
        %v494 = vld [vmem:[%s402 + $0x38] sm:$0xff]
        %v495 = vld [vmem:[%s402 + $0x40] sm:$0xff]
        %v496 = vld [vmem:[%s402 + $0x48] sm:$0xff]
        %v497 = vld [vmem:[%s402 + $0x50] sm:$0xff]
        %v498 = vld [vmem:[%s402 + $0x58] sm:$0xff]
        %v499 = vld [vmem:[%s402 + $0x60] sm:$0xff]
        %v500 = vld [vmem:[%s402 + $0x68] sm:$0xff]
        %v501 = vld [vmem:[%s402 + $0x70] sm:$0xff]
        %v502 = vld [vmem:[%s402 + $0x78] sm:$0xff]
        %v503 = vld [vmem:[#allocation8] sm:$0xf]
        %v504 = vld [vmem:[%s411] sm:$0xff]
        %v505 = vld [vmem:[%s411 + $0x8] sm:$0xff]
        %v506 = vld [vmem:[%s420] sm:$0xff]
        %v507 = vld [vmem:[%s420 + $0x8] sm:$0xff]
        %v508 = vld [vmem:[#allocation10] sm:$0x1]
        %v510 = vlaneseq
        %v511 = vshrl.u32 %v510, 7
        %v512 = vsub.s32 0, %v511
        %v513 = vrot.slane %v508, %v512
        %vm515 = vcmask 31744
        %v517 = vsel %vm515, %v487, 0
        %v520 = vsel %vm515, %v488, 0
        %v523 = vsel %vm515, %v489, 0
        %v526 = vsel %vm515, %v490, 0
        %v529 = vsel %vm515, %v491, 0
        %v532 = vsel %vm515, %v492, 0
        %v535 = vsel %vm515, %v493, 0
        %v538 = vsel %vm515, %v494, 0
        %v541 = vsel %vm515, %v495, 0
        %v544 = vsel %vm515, %v496, 0
        %v547 = vsel %vm515, %v497, 0
        %v550 = vsel %vm515, %v498, 0
        %v553 = vsel %vm515, %v499, 0
        %v556 = vsel %vm515, %v500, 0
        %v559 = vsel %vm515, %v501, 0
        %v562 = vsel %vm515, %v502, 0
        %vm564 = vcmask 1043456
        %v566 = vsel %vm564, %v503, 0
        %568 = vmatprep.subr.mxu0 0.0
        %569 = vmatpush1.msra.mxu0 %v566
        %570 = vmatprep.subr.mxu0 0.0
        %571 = vmatpush1.msra.mxu0 0.0
        %572 = vmatprep.subr.mxu0 0.0
        %573 = vmatpush1.msra.mxu0 0.0
        %574 = vmatprep.subr.mxu0 0.0
        %575 = vmatpush1.msra.mxu0 0.0
        %576 = vmatprep.subr.mxu0 0.0
        %577 = vmatpush1.msra.mxu0 0.0
        %578 = vmatprep.subr.mxu0 0.0
        %579 = vmatpush1.msra.mxu0 0.0
        %580 = vmatprep.subr.mxu0 0.0
        %581 = vmatpush1.msra.mxu0 0.0
        %582 = vmatprep.subr.mxu0 0.0
        %583 = vmatpush1.msra.mxu0 0.0
        %584 = vmatprep.subr.mxu0 0.0
        %585 = vmatpush1.msra.mxu0 0.0
        %586 = vmatprep.subr.mxu0 0.0
        %587 = vmatpush1.msra.mxu0 0.0
        %588 = vmatprep.subr.mxu0 0.0
        %589 = vmatpush1.msra.mxu0 0.0
        %590 = vmatprep.subr.mxu0 0.0
        %591 = vmatpush1.msra.mxu0 0.0
        %592 = vmatprep.subr.mxu0 0.0
        %593 = vmatpush1.msra.mxu0 0.0
        %594 = vmatprep.subr.mxu0 0.0
        %595 = vmatpush1.msra.mxu0 0.0
        %596 = vmatprep.subr.mxu0 0.0
        %597 = vmatpush1.msra.mxu0 0.0
        %598 = vmatprep.subr.mxu0 0.0
        %599 = vmatpush1.msra.mxu0 0.0
        %600 = vmatprep.subr.mxu0 0.0
        %601 = vmatpush1.msra.mxu0 0.0
        %602 = vmatprep.subr.mxu0 0.0
        %603 = vmatpush1.msra.mxu0 0.0
        %604 = vmatprep.subr.mxu0 0.0
        %605 = vmatpush1.msra.mxu0 0.0
        %606 = vmatprep.subr.mxu0 0.0
        %607 = vmatpush1.msra.mxu0 0.0
        %608 = vmatprep.subr.mxu0 0.0
        %609 = vmatpush1.msra.mxu0 0.0
        %610 = vmatprep.subr.mxu0 0.0
        %611 = vmatpush1.msra.mxu0 0.0
        %612 = vmatprep.subr.mxu0 0.0
        %613 = vmatpush1.msra.mxu0 0.0
        %614 = vmatprep.subr.mxu0 0.0
        %615 = vmatpush1.msra.mxu0 0.0
        %616 = vmatprep.subr.mxu0 0.0
        %617 = vmatpush1.msra.mxu0 0.0
        %618 = vmatprep.subr.mxu0 0.0
        %619 = vmatpush1.msra.mxu0 0.0
        %620 = vmatprep.subr.mxu0 0.0
        %621 = vmatpush1.msra.mxu0 0.0
        %622 = vmatprep.subr.mxu0 0.0
        %623 = vmatpush1.msra.mxu0 0.0
        %624 = vmatprep.subr.mxu0 0.0
        %625 = vmatpush1.msra.mxu0 0.0
        %626 = vmatprep.subr.mxu0 0.0
        %627 = vmatpush1.msra.mxu0 0.0
        %628 = vmatprep.subr.mxu0 0.0
        %629 = vmatpush1.msra.mxu0 0.0
        %630 = vmatprep.subr.mxu0 0.0
        %631 = vmatpush1.msra.mxu0 0.0
        %632 = vmatprep.mubr.f32.mxu0 0.0
        %633 = vmatmul.mubr.f32.gmra.mrb[0].mxu0 %v517
        %v634 = vpop.f32.mrb[0].mxu0
        %v635 = vadd.f32 %v513, %v634
        %v636 = vpop.f32.mrb[0].mxu0
        %637 = vmatprep.mubr.f32.mxu0 0.0
        %638 = vmatmul.mubr.f32.gmra.mrb[0].mxu0 %v520
        %v639 = vpop.f32.mrb[0].mxu0
        %v640 = vadd.f32 %v513, %v639
        %v641 = vpop.f32.mrb[0].mxu0
        %642 = vmatprep.mubr.f32.mxu0 0.0
        %643 = vmatmul.mubr.f32.gmra.mrb[0].mxu0 %v523
        %v644 = vpop.f32.mrb[0].mxu0
        %v645 = vadd.f32 %v513, %v644
        %v646 = vpop.f32.mrb[0].mxu0
        %647 = vmatprep.mubr.f32.mxu0 0.0
        %648 = vmatmul.mubr.f32.gmra.mrb[0].mxu0 %v526
        %v649 = vpop.f32.mrb[0].mxu0
        %v650 = vadd.f32 %v513, %v649
        %v651 = vpop.f32.mrb[0].mxu0
        %652 = vmatprep.mubr.f32.mxu0 0.0
        %653 = vmatmul.mubr.f32.gmra.mrb[0].mxu0 %v529
        %v654 = vpop.f32.mrb[0].mxu0
        %v655 = vadd.f32 %v513, %v654
        %v656 = vpop.f32.mrb[0].mxu0
        %657 = vmatprep.mubr.f32.mxu0 0.0
        %658 = vmatmul.mubr.f32.gmra.mrb[0].mxu0 %v532
        %v659 = vpop.f32.mrb[0].mxu0
        %v660 = vadd.f32 %v513, %v659
        %v661 = vpop.f32.mrb[0].mxu0
        %662 = vmatprep.mubr.f32.mxu0 0.0
        %663 = vmatmul.mubr.f32.gmra.mrb[0].mxu0 %v535
        %v664 = vpop.f32.mrb[0].mxu0
        %v665 = vadd.f32 %v513, %v664
        %v666 = vpop.f32.mrb[0].mxu0
        %667 = vmatprep.mubr.f32.mxu0 0.0
        %668 = vmatmul.mubr.f32.gmra.mrb[0].mxu0 %v538
        %v669 = vpop.f32.mrb[0].mxu0
        %v670 = vadd.f32 %v513, %v669
        %v671 = vpop.f32.mrb[0].mxu0
        %672 = vmatprep.mubr.f32.mxu0 0.0
        %673 = vmatmul.mubr.f32.gmra.mrb[0].mxu0 %v541
        %v674 = vpop.f32.mrb[0].mxu0
        %v675 = vadd.f32 %v513, %v674
        %v676 = vpop.f32.mrb[0].mxu0
        %677 = vmatprep.mubr.f32.mxu0 0.0
        %678 = vmatmul.mubr.f32.gmra.mrb[0].mxu0 %v544
        %v679 = vpop.f32.mrb[0].mxu0
        %v680 = vadd.f32 %v513, %v679
        %v681 = vpop.f32.mrb[0].mxu0
        %682 = vmatprep.mubr.f32.mxu0 0.0
        %683 = vmatmul.mubr.f32.gmra.mrb[0].mxu0 %v547
        %v684 = vpop.f32.mrb[0].mxu0
        %v685 = vadd.f32 %v513, %v684
        %v686 = vpop.f32.mrb[0].mxu0
        %687 = vmatprep.mubr.f32.mxu0 0.0
        %688 = vmatmul.mubr.f32.gmra.mrb[0].mxu0 %v550
        %v689 = vpop.f32.mrb[0].mxu0
        %v690 = vadd.f32 %v513, %v689
        %v691 = vpop.f32.mrb[0].mxu0
        %692 = vmatprep.mubr.f32.mxu0 0.0
        %693 = vmatmul.mubr.f32.gmra.mrb[0].mxu0 %v553
        %v694 = vpop.f32.mrb[0].mxu0
        %v695 = vadd.f32 %v513, %v694
        %v696 = vpop.f32.mrb[0].mxu0
        %697 = vmatprep.mubr.f32.mxu0 0.0
        %698 = vmatmul.mubr.f32.gmra.mrb[0].mxu0 %v556
        %v699 = vpop.f32.mrb[0].mxu0
        %v700 = vadd.f32 %v513, %v699
        %v701 = vpop.f32.mrb[0].mxu0
        %702 = vmatprep.mubr.f32.mxu0 0.0
        %703 = vmatmul.mubr.f32.gmra.mrb[0].mxu0 %v559
        %v704 = vpop.f32.mrb[0].mxu0
        %v705 = vadd.f32 %v513, %v704
        %v706 = vpop.f32.mrb[0].mxu0
        %707 = vmatprep.mubr.f32.mxu0 0.0
        %708 = vmatmul.mubr.f32.gmra.mrb[0].mxu0 %v562
        %v709 = vpop.f32.mrb[0].mxu0
        %v710 = vadd.f32 %v513, %v709
        %v711 = vpop.f32.mrb[0].mxu0
        %712 = vdwg.mxu0
        %v713 = vmax.f32 %v635, 0.0
        %v714 = vmax.f32 %v640, 0.0
        %v715 = vmax.f32 %v645, 0.0
        %v716 = vmax.f32 %v650, 0.0
        %v717 = vmax.f32 %v655, 0.0
        %v718 = vmax.f32 %v660, 0.0
        %v719 = vmax.f32 %v665, 0.0
        %v720 = vmax.f32 %v670, 0.0
        %v721 = vmax.f32 %v675, 0.0
        %v722 = vmax.f32 %v680, 0.0
        %v723 = vmax.f32 %v685, 0.0
        %v724 = vmax.f32 %v690, 0.0
        %v725 = vmax.f32 %v695, 0.0
        %v726 = vmax.f32 %v700, 0.0
        %v727 = vmax.f32 %v705, 0.0
        %v728 = vmax.f32 %v710, 0.0
        %v730 = vsel %vm515, %v504, 0
        %v733 = vsel %vm515, %v505, 0
        %v736 = vsel %vm515, %v506, 0
        %v739 = vsel %vm515, %v507, 0
        %741 = vmatprep.subr.mxu0 0.0
        %742 = vmatpush1.msra.mxu0 %v566
        %743 = vmatprep.subr.mxu0 0.0
        %744 = vmatpush1.msra.mxu0 0.0
        %745 = vmatprep.subr.mxu0 0.0
        %746 = vmatpush1.msra.mxu0 0.0
        %747 = vmatprep.subr.mxu0 0.0
        %748 = vmatpush1.msra.mxu0 0.0
        %749 = vmatprep.subr.mxu0 0.0
        %750 = vmatpush1.msra.mxu0 0.0
        %751 = vmatprep.subr.mxu0 0.0
        %752 = vmatpush1.msra.mxu0 0.0
        %753 = vmatprep.subr.mxu0 0.0
        %754 = vmatpush1.msra.mxu0 0.0
        %755 = vmatprep.subr.mxu0 0.0
        %756 = vmatpush1.msra.mxu0 0.0
        %757 = vmatprep.subr.mxu0 0.0
        %758 = vmatpush1.msra.mxu0 0.0
        %759 = vmatprep.subr.mxu0 0.0
        %760 = vmatpush1.msra.mxu0 0.0
        %761 = vmatprep.subr.mxu0 0.0
        %762 = vmatpush1.msra.mxu0 0.0
        %763 = vmatprep.subr.mxu0 0.0
        %764 = vmatpush1.msra.mxu0 0.0
        %765 = vmatprep.subr.mxu0 0.0
        %766 = vmatpush1.msra.mxu0 0.0
        %767 = vmatprep.subr.mxu0 0.0
        %768 = vmatpush1.msra.mxu0 0.0
        %769 = vmatprep.subr.mxu0 0.0
        %770 = vmatpush1.msra.mxu0 0.0
        %771 = vmatprep.subr.mxu0 0.0
        %772 = vmatpush1.msra.mxu0 0.0
        %773 = vmatprep.subr.mxu0 0.0
        %774 = vmatpush1.msra.mxu0 0.0
        %775 = vmatprep.subr.mxu0 0.0
        %776 = vmatpush1.msra.mxu0 0.0
        %777 = vmatprep.subr.mxu0 0.0
        %778 = vmatpush1.msra.mxu0 0.0
        %779 = vmatprep.subr.mxu0 0.0
        %780 = vmatpush1.msra.mxu0 0.0
        %781 = vmatprep.subr.mxu0 0.0
        %782 = vmatpush1.msra.mxu0 0.0
        %783 = vmatprep.subr.mxu0 0.0
        %784 = vmatpush1.msra.mxu0 0.0
        %785 = vmatprep.subr.mxu0 0.0
        %786 = vmatpush1.msra.mxu0 0.0
        %787 = vmatprep.subr.mxu0 0.0
        %788 = vmatpush1.msra.mxu0 0.0
        %789 = vmatprep.subr.mxu0 0.0
        %790 = vmatpush1.msra.mxu0 0.0
        %791 = vmatprep.subr.mxu0 0.0
        %792 = vmatpush1.msra.mxu0 0.0
        %793 = vmatprep.subr.mxu0 0.0
        %794 = vmatpush1.msra.mxu0 0.0
        %795 = vmatprep.subr.mxu0 0.0
        %796 = vmatpush1.msra.mxu0 0.0
        %797 = vmatprep.subr.mxu0 0.0
        %798 = vmatpush1.msra.mxu0 0.0
        %799 = vmatprep.subr.mxu0 0.0
        %800 = vmatpush1.msra.mxu0 0.0
        %801 = vmatprep.subr.mxu0 0.0
        %802 = vmatpush1.msra.mxu0 0.0
        %803 = vmatprep.subr.mxu0 0.0
        %804 = vmatpush1.msra.mxu0 0.0
        %805 = vmatprep.mubr.f32.mxu0 0.0
        %806 = vmatmul.mubr.f32.gmra.mrb[0].mxu0 %v730
        %v807 = vpop.f32.mrb[0].mxu0
        %v808 = vadd.f32 %v513, %v807
        %v809 = vpop.f32.mrb[0].mxu0
        %810 = vmatprep.mubr.f32.mxu0 0.0
        %811 = vmatmul.mubr.f32.gmra.mrb[0].mxu0 %v733
        %v812 = vpop.f32.mrb[0].mxu0
        %v813 = vadd.f32 %v513, %v812
        %v814 = vpop.f32.mrb[0].mxu0
        %815 = vmatprep.mubr.f32.mxu0 0.0
        %816 = vmatmul.mubr.f32.gmra.mrb[0].mxu0 %v736
        %v817 = vpop.f32.mrb[0].mxu0
        %v818 = vadd.f32 %v513, %v817
        %v819 = vpop.f32.mrb[0].mxu0
        %820 = vmatprep.mubr.f32.mxu0 0.0
        %821 = vmatmul.mubr.f32.gmra.mrb[0].mxu0 %v739
        %v822 = vpop.f32.mrb[0].mxu0
        %v823 = vadd.f32 %v513, %v822
        %v824 = vpop.f32.mrb[0].mxu0
        %825 = vdwg.mxu0
        %v826 = vmax.f32 %v808, 0.0
        %v827 = vmax.f32 %v813, 0.0
        %v828 = vmax.f32 %v818, 0.0
        %v829 = vmax.f32 %v823, 0.0
        %s830 = smul.u32 %s34, 8
        %s831 = ssub.s32 %s830, 1
        %v832 = vstv %s831
        %v833 = vadd.s32 %v832, 1
        %v834 = vadd.s32 %v832, 2
        %v835 = vadd.s32 %v832, 3
        %v836 = vadd.s32 %v832, 4
        %v837 = vadd.s32 %v832, 5
        %v838 = vadd.s32 %v832, 6
        %v839 = vadd.s32 %v832, 7
        %v840 = vadd.s32 %v832, 8
        %v841 = vadd.s32 %v832, 9
        %vm842 = vcmp.ge.s32.totalorder %v832, 0
        %vm843 = vcmp.ge.s32.totalorder %v833, 0
        %vm844 = vcmp.ge.s32.totalorder %v834, 0
        %vm845 = vcmp.ge.s32.totalorder %v835, 0
        %vm846 = vcmp.ge.s32.totalorder %v836, 0
        %vm847 = vcmp.ge.s32.totalorder %v837, 0
        %vm848 = vcmp.ge.s32.totalorder %v838, 0
        %vm849 = vcmp.ge.s32.totalorder %v839, 0
        %vm850 = vcmp.ge.s32.totalorder %v840, 0
        %vm851 = vcmp.ge.s32.totalorder %v841, 0
        %vm852 = vcmp.lt.s32.totalorder %v832, 16
        %vm853 = vcmp.lt.s32.totalorder %v833, 16
        %vm854 = vcmp.lt.s32.totalorder %v834, 16
        %vm855 = vcmp.lt.s32.totalorder %v835, 16
        %vm856 = vcmp.lt.s32.totalorder %v836, 16
        %vm857 = vcmp.lt.s32.totalorder %v837, 16
        %vm858 = vcmp.lt.s32.totalorder %v838, 16
        %vm859 = vcmp.lt.s32.totalorder %v839, 16
        %vm860 = vcmp.lt.s32.totalorder %v840, 16
        %vm861 = vcmp.lt.s32.totalorder %v841, 16
        %vm862 = vmand %vm842, %vm852
        %vm863 = vmand %vm843, %vm853
        %vm864 = vmand %vm844, %vm854
        %vm865 = vmand %vm845, %vm855
        %vm866 = vmand %vm846, %vm856
        %vm867 = vmand %vm847, %vm857
        %vm868 = vmand %vm848, %vm858
        %vm869 = vmand %vm849, %vm859
        %vm870 = vmand %vm850, %vm860
        %vm871 = vmand %vm851, %vm861
        %v872 = vsel %vm862, 1, 0
        %v873 = vsel %vm863, 1, 0
        %v874 = vsel %vm864, 1, 0
        %v875 = vsel %vm865, 1, 0
        %v876 = vsel %vm866, 1, 0
        %v877 = vsel %vm867, 1, 0
        %v878 = vsel %vm868, 1, 0
        %v879 = vsel %vm869, 1, 0
        %v880 = vsel %vm870, 1, 0
        %v881 = vsel %vm871, 1, 0
        %vm882 = vcmp.eq.s32.totalorder %v872, 1
        %vm883 = vcmp.eq.s32.totalorder %v873, 1
        %vm884 = vcmp.eq.s32.totalorder %v874, 1
        %vm885 = vcmp.eq.s32.totalorder %v875, 1
        %vm886 = vcmp.eq.s32.totalorder %v876, 1
        %vm887 = vcmp.eq.s32.totalorder %v877, 1
        %vm888 = vcmp.eq.s32.totalorder %v878, 1
        %vm889 = vcmp.eq.s32.totalorder %v879, 1
        %vm890 = vcmp.eq.s32.totalorder %v880, 1
        %vm891 = vcmp.eq.s32.totalorder %v881, 1
        %v892 = vsel %vm882, %v826, 0.0
        %v893 = vsel %vm882, %v827, 0.0
        %v894 = vsel %vm883, %v713, 0.0
        %v895 = vsel %vm883, %v714, 0.0
        %v896 = vsel %vm884, %v715, 0.0
        %v897 = vsel %vm884, %v716, 0.0
        %v898 = vsel %vm885, %v717, 0.0
        %v899 = vsel %vm885, %v718, 0.0
        %v900 = vsel %vm886, %v719, 0.0
        %v901 = vsel %vm886, %v720, 0.0
        %v902 = vsel %vm887, %v721, 0.0
        %v903 = vsel %vm887, %v722, 0.0
        %v904 = vsel %vm888, %v723, 0.0
        %v905 = vsel %vm888, %v724, 0.0
        %v906 = vsel %vm889, %v725, 0.0
        %v907 = vsel %vm889, %v726, 0.0
        %v908 = vsel %vm890, %v727, 0.0
        %v909 = vsel %vm890, %v728, 0.0
        %v910 = vsel %vm891, %v828, 0.0
        %v911 = vsel %vm891, %v829, 0.0
        %vm932 = vcmask 1040384
        %v933 = vrot.slane %v892, 7
        %v934 = vrot.slane %v893, 7
        %v935 = vsel %vm932, %v933, %v934
        %v936 = vrot.slane %v894, 7
        %v937 = vrot.slane %v895, 7
        %v938 = vsel %vm932, %v936, %v937
        %v939 = vrot.slane %v896, 7
        %v940 = vrot.slane %v897, 7
        %v941 = vsel %vm932, %v939, %v940
        %v942 = vrot.slane %v898, 7
        %v943 = vrot.slane %v899, 7
        %v944 = vsel %vm932, %v942, %v943
        %v945 = vrot.slane %v900, 7
        %v946 = vrot.slane %v901, 7
        %v947 = vsel %vm932, %v945, %v946
        %v948 = vrot.slane %v902, 7
        %v949 = vrot.slane %v903, 7
        %v950 = vsel %vm932, %v948, %v949
        %v951 = vrot.slane %v904, 7
        %v952 = vrot.slane %v905, 7
        %v953 = vsel %vm932, %v951, %v952
        %v954 = vrot.slane %v906, 7
        %v955 = vrot.slane %v907, 7
        %v956 = vsel %vm932, %v954, %v955
        %v957 = vrot.slane %v908, 7
        %v958 = vrot.slane %v909, 7
        %v959 = vsel %vm932, %v957, %v958
        %v960 = vrot.slane %v910, 7
        %v961 = vrot.slane %v911, 7
        %v962 = vsel %vm932, %v960, %v961
        %v981 = vsel %vm932, 0.0, %v933
        %v982 = vsel %vm932, 0.0, %v936
        %v983 = vsel %vm932, 0.0, %v939
        %v984 = vsel %vm932, 0.0, %v942
        %v985 = vsel %vm932, 0.0, %v945
        %v986 = vsel %vm932, 0.0, %v948
        %v987 = vsel %vm932, 0.0, %v951
        %v988 = vsel %vm932, 0.0, %v954
        %v989 = vsel %vm932, 0.0, %v957
        %v990 = vsel %vm932, 0.0, %v960
        %vm991 = vcmask 1046528
        %v992 = vrot.slane %v892, 1
        %v993 = vrot.slane %v893, 1
        %v994 = vsel %vm991, %v992, %v993
        %v995 = vrot.slane %v894, 1
        %v996 = vrot.slane %v895, 1
        %v997 = vsel %vm991, %v995, %v996
        %v998 = vrot.slane %v896, 1
        %v999 = vrot.slane %v897, 1
        %v1000 = vsel %vm991, %v998, %v999
        %v1001 = vrot.slane %v898, 1
        %v1002 = vrot.slane %v899, 1
        %v1003 = vsel %vm991, %v1001, %v1002
        %v1004 = vrot.slane %v900, 1
        %v1005 = vrot.slane %v901, 1
        %v1006 = vsel %vm991, %v1004, %v1005
        %v1007 = vrot.slane %v902, 1
        %v1008 = vrot.slane %v903, 1
        %v1009 = vsel %vm991, %v1007, %v1008
        %v1010 = vrot.slane %v904, 1
        %v1011 = vrot.slane %v905, 1
        %v1012 = vsel %vm991, %v1010, %v1011
        %v1013 = vrot.slane %v906, 1
        %v1014 = vrot.slane %v907, 1
        %v1015 = vsel %vm991, %v1013, %v1014
        %v1016 = vrot.slane %v908, 1
        %v1017 = vrot.slane %v909, 1
        %v1018 = vsel %vm991, %v1016, %v1017
        %v1019 = vrot.slane %v910, 1
        %v1020 = vrot.slane %v911, 1
        %v1021 = vsel %vm991, %v1019, %v1020
        %v1032 = vsel %vm991, %v993, 0.0
        %v1033 = vsel %vm991, %v996, 0.0
        %v1034 = vsel %vm991, %v999, 0.0
        %v1035 = vsel %vm991, %v1002, 0.0
        %v1036 = vsel %vm991, %v1005, 0.0
        %v1037 = vsel %vm991, %v1008, 0.0
        %v1038 = vsel %vm991, %v1011, 0.0
        %v1039 = vsel %vm991, %v1014, 0.0
        %v1040 = vsel %vm991, %v1017, 0.0
        %v1041 = vsel %vm991, %v1020, 0.0
        %1050 = vrot.lane.b32.xlu0 %v982, 4
        %v1051 = vpop.permute.xlu0 %1050
        %1052 = vrot.lane.b32.xlu0 %v938, 4
        %v1053 = vpop.permute.xlu0 %1052
        %1054 = vrot.lane.b32.xlu0 %v983, 4
        %v1055 = vpop.permute.xlu0 %1054
        %1056 = vrot.lane.b32.xlu0 %v941, 4
        %v1057 = vpop.permute.xlu0 %1056
        %1058 = vrot.lane.b32.xlu0 %v984, 4
        %v1059 = vpop.permute.xlu0 %1058
        %1060 = vrot.lane.b32.xlu0 %v944, 4
        %v1061 = vpop.permute.xlu0 %1060
        %1062 = vrot.lane.b32.xlu0 %v985, 4
        %v1063 = vpop.permute.xlu0 %1062
        %1064 = vrot.lane.b32.xlu0 %v947, 4
        %v1065 = vpop.permute.xlu0 %1064
        %1066 = vrot.lane.b32.xlu0 %v986, 4
        %v1067 = vpop.permute.xlu0 %1066
        %1068 = vrot.lane.b32.xlu0 %v950, 4
        %v1069 = vpop.permute.xlu0 %1068
        %1070 = vrot.lane.b32.xlu0 %v987, 4
        %v1071 = vpop.permute.xlu0 %1070
        %1072 = vrot.lane.b32.xlu0 %v953, 4
        %v1073 = vpop.permute.xlu0 %1072
        %1074 = vrot.lane.b32.xlu0 %v988, 4
        %v1075 = vpop.permute.xlu0 %1074
        %1076 = vrot.lane.b32.xlu0 %v956, 4
        %v1077 = vpop.permute.xlu0 %1076
        %1078 = vrot.lane.b32.xlu0 %v989, 4
        %v1079 = vpop.permute.xlu0 %1078
        %1080 = vrot.lane.b32.xlu0 %v959, 4
        %v1081 = vpop.permute.xlu0 %1080
        %1099 = vrot.lane.b32.xlu0 %v983, 8
        %v1100 = vpop.permute.xlu0 %1099
        %1101 = vrot.lane.b32.xlu0 %v941, 8
        %v1102 = vpop.permute.xlu0 %1101
        %1103 = vrot.lane.b32.xlu0 %v984, 8
        %v1104 = vpop.permute.xlu0 %1103
        %1105 = vrot.lane.b32.xlu0 %v944, 8
        %v1106 = vpop.permute.xlu0 %1105
        %1107 = vrot.lane.b32.xlu0 %v985, 8
        %v1108 = vpop.permute.xlu0 %1107
        %1109 = vrot.lane.b32.xlu0 %v947, 8
        %v1110 = vpop.permute.xlu0 %1109
        %1111 = vrot.lane.b32.xlu0 %v986, 8
        %v1112 = vpop.permute.xlu0 %1111
        %1113 = vrot.lane.b32.xlu0 %v950, 8
        %v1114 = vpop.permute.xlu0 %1113
        %1115 = vrot.lane.b32.xlu0 %v987, 8
        %v1116 = vpop.permute.xlu0 %1115
        %1117 = vrot.lane.b32.xlu0 %v953, 8
        %v1118 = vpop.permute.xlu0 %1117
        %1119 = vrot.lane.b32.xlu0 %v988, 8
        %v1120 = vpop.permute.xlu0 %1119
        %1121 = vrot.lane.b32.xlu0 %v956, 8
        %v1122 = vpop.permute.xlu0 %1121
        %1123 = vrot.lane.b32.xlu0 %v989, 8
        %v1124 = vpop.permute.xlu0 %1123
        %1125 = vrot.lane.b32.xlu0 %v959, 8
        %v1126 = vpop.permute.xlu0 %1125
        %1127 = vrot.lane.b32.xlu0 %v990, 8
        %v1128 = vpop.permute.xlu0 %1127
        %1129 = vrot.lane.b32.xlu0 %v962, 8
        %v1130 = vpop.permute.xlu0 %1129
        %1147 = vrot.lane.b32.xlu0 %v892, 12
        %v1148 = vpop.permute.xlu0 %1147
        %1149 = vrot.lane.b32.xlu0 %v893, 12
        %v1150 = vpop.permute.xlu0 %1149
        %1151 = vrot.lane.b32.xlu0 %v894, 12
        %v1152 = vpop.permute.xlu0 %1151
        %1153 = vrot.lane.b32.xlu0 %v895, 12
        %v1154 = vpop.permute.xlu0 %1153
        %1155 = vrot.lane.b32.xlu0 %v896, 12
        %v1156 = vpop.permute.xlu0 %1155
        %1157 = vrot.lane.b32.xlu0 %v897, 12
        %v1158 = vpop.permute.xlu0 %1157
        %1159 = vrot.lane.b32.xlu0 %v898, 12
        %v1160 = vpop.permute.xlu0 %1159
        %1161 = vrot.lane.b32.xlu0 %v899, 12
        %v1162 = vpop.permute.xlu0 %1161
        %1163 = vrot.lane.b32.xlu0 %v900, 12
        %v1164 = vpop.permute.xlu0 %1163
        %1165 = vrot.lane.b32.xlu0 %v901, 12
        %v1166 = vpop.permute.xlu0 %1165
        %1167 = vrot.lane.b32.xlu0 %v902, 12
        %v1168 = vpop.permute.xlu0 %1167
        %1169 = vrot.lane.b32.xlu0 %v903, 12
        %v1170 = vpop.permute.xlu0 %1169
        %1171 = vrot.lane.b32.xlu0 %v904, 12
        %v1172 = vpop.permute.xlu0 %1171
        %1173 = vrot.lane.b32.xlu0 %v905, 12
        %v1174 = vpop.permute.xlu0 %1173
        %1175 = vrot.lane.b32.xlu0 %v906, 12
        %v1176 = vpop.permute.xlu0 %1175
        %1177 = vrot.lane.b32.xlu0 %v907, 12
        %v1178 = vpop.permute.xlu0 %1177
        %1195 = vrot.lane.b32.xlu0 %v894, 16
        %v1196 = vpop.permute.xlu0 %1195
        %1197 = vrot.lane.b32.xlu0 %v895, 16
        %v1198 = vpop.permute.xlu0 %1197
        %1199 = vrot.lane.b32.xlu0 %v896, 16
        %v1200 = vpop.permute.xlu0 %1199
        %1201 = vrot.lane.b32.xlu0 %v897, 16
        %v1202 = vpop.permute.xlu0 %1201
        %1203 = vrot.lane.b32.xlu0 %v898, 16
        %v1204 = vpop.permute.xlu0 %1203
        %1205 = vrot.lane.b32.xlu0 %v899, 16
        %v1206 = vpop.permute.xlu0 %1205
        %1207 = vrot.lane.b32.xlu0 %v900, 16
        %v1208 = vpop.permute.xlu0 %1207
        %1209 = vrot.lane.b32.xlu0 %v901, 16
        %v1210 = vpop.permute.xlu0 %1209
        %1211 = vrot.lane.b32.xlu0 %v902, 16
        %v1212 = vpop.permute.xlu0 %1211
        %1213 = vrot.lane.b32.xlu0 %v903, 16
        %v1214 = vpop.permute.xlu0 %1213
        %1215 = vrot.lane.b32.xlu0 %v904, 16
        %v1216 = vpop.permute.xlu0 %1215
        %1217 = vrot.lane.b32.xlu0 %v905, 16
        %v1218 = vpop.permute.xlu0 %1217
        %1219 = vrot.lane.b32.xlu0 %v906, 16
        %v1220 = vpop.permute.xlu0 %1219
        %1221 = vrot.lane.b32.xlu0 %v907, 16
        %v1222 = vpop.permute.xlu0 %1221
        %1223 = vrot.lane.b32.xlu0 %v908, 16
        %v1224 = vpop.permute.xlu0 %1223
        %1225 = vrot.lane.b32.xlu0 %v909, 16
        %v1226 = vpop.permute.xlu0 %1225
        %1243 = vrot.lane.b32.xlu0 %v896, 20
        %v1244 = vpop.permute.xlu0 %1243
        %1245 = vrot.lane.b32.xlu0 %v897, 20
        %v1246 = vpop.permute.xlu0 %1245
        %1247 = vrot.lane.b32.xlu0 %v898, 20
        %v1248 = vpop.permute.xlu0 %1247
        %1249 = vrot.lane.b32.xlu0 %v899, 20
        %v1250 = vpop.permute.xlu0 %1249
        %1251 = vrot.lane.b32.xlu0 %v900, 20
        %v1252 = vpop.permute.xlu0 %1251
        %1253 = vrot.lane.b32.xlu0 %v901, 20
        %v1254 = vpop.permute.xlu0 %1253
        %1255 = vrot.lane.b32.xlu0 %v902, 20
        %v1256 = vpop.permute.xlu0 %1255
        %1257 = vrot.lane.b32.xlu0 %v903, 20
        %v1258 = vpop.permute.xlu0 %1257
        %1259 = vrot.lane.b32.xlu0 %v904, 20
        %v1260 = vpop.permute.xlu0 %1259
        %1261 = vrot.lane.b32.xlu0 %v905, 20
        %v1262 = vpop.permute.xlu0 %1261
        %1263 = vrot.lane.b32.xlu0 %v906, 20
        %v1264 = vpop.permute.xlu0 %1263
        %1265 = vrot.lane.b32.xlu0 %v907, 20
        %v1266 = vpop.permute.xlu0 %1265
        %1267 = vrot.lane.b32.xlu0 %v908, 20
        %v1268 = vpop.permute.xlu0 %1267
        %1269 = vrot.lane.b32.xlu0 %v909, 20
        %v1270 = vpop.permute.xlu0 %1269
        %1271 = vrot.lane.b32.xlu0 %v910, 20
        %v1272 = vpop.permute.xlu0 %1271
        %1273 = vrot.lane.b32.xlu0 %v911, 20
        %v1274 = vpop.permute.xlu0 %1273
        %1299 = vrot.lane.b32.xlu0 %v994, 24
        %v1300 = vpop.permute.xlu0 %1299
        %1301 = vrot.lane.b32.xlu0 %v1032, 24
        %v1302 = vpop.permute.xlu0 %1301
        %1303 = vrot.lane.b32.xlu0 %v997, 24
        %v1304 = vpop.permute.xlu0 %1303
        %1305 = vrot.lane.b32.xlu0 %v1033, 24
        %v1306 = vpop.permute.xlu0 %1305
        %1307 = vrot.lane.b32.xlu0 %v1000, 24
        %v1308 = vpop.permute.xlu0 %1307
        %1309 = vrot.lane.b32.xlu0 %v1034, 24
        %v1310 = vpop.permute.xlu0 %1309
        %1311 = vrot.lane.b32.xlu0 %v1003, 24
        %v1312 = vpop.permute.xlu0 %1311
        %1313 = vrot.lane.b32.xlu0 %v1035, 24
        %v1314 = vpop.permute.xlu0 %1313
        %1315 = vrot.lane.b32.xlu0 %v1006, 24
        %v1316 = vpop.permute.xlu0 %1315
        %1317 = vrot.lane.b32.xlu0 %v1036, 24
        %v1318 = vpop.permute.xlu0 %1317
        %1319 = vrot.lane.b32.xlu0 %v1009, 24
        %v1320 = vpop.permute.xlu0 %1319
        %1321 = vrot.lane.b32.xlu0 %v1037, 24
        %v1322 = vpop.permute.xlu0 %1321
        %1323 = vrot.lane.b32.xlu0 %v1012, 24
        %v1324 = vpop.permute.xlu0 %1323
        %1325 = vrot.lane.b32.xlu0 %v1038, 24
        %v1326 = vpop.permute.xlu0 %1325
        %1327 = vrot.lane.b32.xlu0 %v1015, 24
        %v1328 = vpop.permute.xlu0 %1327
        %1329 = vrot.lane.b32.xlu0 %v1039, 24
        %v1330 = vpop.permute.xlu0 %1329
        %1348 = vrot.lane.b32.xlu0 %v997, 28
        %v1349 = vpop.permute.xlu0 %1348
        %1350 = vrot.lane.b32.xlu0 %v1033, 28
        %v1351 = vpop.permute.xlu0 %1350
        %1352 = vrot.lane.b32.xlu0 %v1000, 28
        %v1353 = vpop.permute.xlu0 %1352
        %1354 = vrot.lane.b32.xlu0 %v1034, 28
        %v1355 = vpop.permute.xlu0 %1354
        %1356 = vrot.lane.b32.xlu0 %v1003, 28
        %v1357 = vpop.permute.xlu0 %1356
        %1358 = vrot.lane.b32.xlu0 %v1035, 28
        %v1359 = vpop.permute.xlu0 %1358
        %1360 = vrot.lane.b32.xlu0 %v1006, 28
        %v1361 = vpop.permute.xlu0 %1360
        %1362 = vrot.lane.b32.xlu0 %v1036, 28
        %v1363 = vpop.permute.xlu0 %1362
        %1364 = vrot.lane.b32.xlu0 %v1009, 28
        %v1365 = vpop.permute.xlu0 %1364
        %1366 = vrot.lane.b32.xlu0 %v1037, 28
        %v1367 = vpop.permute.xlu0 %1366
        %1368 = vrot.lane.b32.xlu0 %v1012, 28
        %v1369 = vpop.permute.xlu0 %1368
        %1370 = vrot.lane.b32.xlu0 %v1038, 28
        %v1371 = vpop.permute.xlu0 %1370
        %1372 = vrot.lane.b32.xlu0 %v1015, 28
        %v1373 = vpop.permute.xlu0 %1372
        %1374 = vrot.lane.b32.xlu0 %v1039, 28
        %v1375 = vpop.permute.xlu0 %1374
        %1376 = vrot.lane.b32.xlu0 %v1018, 28
        %v1377 = vpop.permute.xlu0 %1376
        %1378 = vrot.lane.b32.xlu0 %v1040, 28
        %v1379 = vpop.permute.xlu0 %1378
        %1397 = vrot.lane.b32.xlu0 %v1000, 32
        %v1398 = vpop.permute.xlu0 %1397
        %1399 = vrot.lane.b32.xlu0 %v1034, 32
        %v1400 = vpop.permute.xlu0 %1399
        %1401 = vrot.lane.b32.xlu0 %v1003, 32
        %v1402 = vpop.permute.xlu0 %1401
        %1403 = vrot.lane.b32.xlu0 %v1035, 32
        %v1404 = vpop.permute.xlu0 %1403
        %1405 = vrot.lane.b32.xlu0 %v1006, 32
        %v1406 = vpop.permute.xlu0 %1405
        %1407 = vrot.lane.b32.xlu0 %v1036, 32
        %v1408 = vpop.permute.xlu0 %1407
        %1409 = vrot.lane.b32.xlu0 %v1009, 32
        %v1410 = vpop.permute.xlu0 %1409
        %1411 = vrot.lane.b32.xlu0 %v1037, 32
        %v1412 = vpop.permute.xlu0 %1411
        %1413 = vrot.lane.b32.xlu0 %v1012, 32
        %v1414 = vpop.permute.xlu0 %1413
        %1415 = vrot.lane.b32.xlu0 %v1038, 32
        %v1416 = vpop.permute.xlu0 %1415
        %1417 = vrot.lane.b32.xlu0 %v1015, 32
        %v1418 = vpop.permute.xlu0 %1417
        %1419 = vrot.lane.b32.xlu0 %v1039, 32
        %v1420 = vpop.permute.xlu0 %1419
        %1421 = vrot.lane.b32.xlu0 %v1018, 32
        %v1422 = vpop.permute.xlu0 %1421
        %1423 = vrot.lane.b32.xlu0 %v1040, 32
        %v1424 = vpop.permute.xlu0 %1423
        %1425 = vrot.lane.b32.xlu0 %v1021, 32
        %v1426 = vpop.permute.xlu0 %1425
        %1427 = vrot.lane.b32.xlu0 %v1041, 32
        %v1428 = vpop.permute.xlu0 %1427
        %v1445 = vsel %vm515, %v981, %v1051
        %v1446 = vsel %vm515, %v935, %v1053
        %v1447 = vsel %vm515, %v982, %v1055
        %v1448 = vsel %vm515, %v938, %v1057
        %v1449 = vsel %vm515, %v983, %v1059
        %v1450 = vsel %vm515, %v941, %v1061
        %v1451 = vsel %vm515, %v984, %v1063
        %v1452 = vsel %vm515, %v944, %v1065
        %v1453 = vsel %vm515, %v985, %v1067
        %v1454 = vsel %vm515, %v947, %v1069
        %v1455 = vsel %vm515, %v986, %v1071
        %v1456 = vsel %vm515, %v950, %v1073
        %v1457 = vsel %vm515, %v987, %v1075
        %v1458 = vsel %vm515, %v953, %v1077
        %v1459 = vsel %vm515, %v988, %v1079
        %v1460 = vsel %vm515, %v956, %v1081
        %vm1461 = vcmask 64512
        %v1462 = vsel %vm1461, %v1445, %v1100
        %v1463 = vsel %vm1461, %v1446, %v1102
        %v1464 = vsel %vm1461, %v1447, %v1104
        %v1465 = vsel %vm1461, %v1448, %v1106
        %v1466 = vsel %vm1461, %v1449, %v1108
        %v1467 = vsel %vm1461, %v1450, %v1110
        %v1468 = vsel %vm1461, %v1451, %v1112
        %v1469 = vsel %vm1461, %v1452, %v1114
        %v1470 = vsel %vm1461, %v1453, %v1116
        %v1471 = vsel %vm1461, %v1454, %v1118
        %v1472 = vsel %vm1461, %v1455, %v1120
        %v1473 = vsel %vm1461, %v1456, %v1122
        %v1474 = vsel %vm1461, %v1457, %v1124
        %v1475 = vsel %vm1461, %v1458, %v1126
        %v1476 = vsel %vm1461, %v1459, %v1128
        %v1477 = vsel %vm1461, %v1460, %v1130
        %vm1478 = vcmask 97280
        %v1479 = vsel %vm1478, %v1462, %v1148
        %v1480 = vsel %vm1478, %v1463, %v1150
        %v1481 = vsel %vm1478, %v1464, %v1152
        %v1482 = vsel %vm1478, %v1465, %v1154
        %v1483 = vsel %vm1478, %v1466, %v1156
        %v1484 = vsel %vm1478, %v1467, %v1158
        %v1485 = vsel %vm1478, %v1468, %v1160
        %v1486 = vsel %vm1478, %v1469, %v1162
        %v1487 = vsel %vm1478, %v1470, %v1164
        %v1488 = vsel %vm1478, %v1471, %v1166
        %v1489 = vsel %vm1478, %v1472, %v1168
        %v1490 = vsel %vm1478, %v1473, %v1170
        %v1491 = vsel %vm1478, %v1474, %v1172
        %v1492 = vsel %vm1478, %v1475, %v1174
        %v1493 = vsel %vm1478, %v1476, %v1176
        %v1494 = vsel %vm1478, %v1477, %v1178
        %vm1495 = vcmask 130048
        %v1496 = vsel %vm1495, %v1479, %v1196
        %v1497 = vsel %vm1495, %v1480, %v1198
        %v1498 = vsel %vm1495, %v1481, %v1200
        %v1499 = vsel %vm1495, %v1482, %v1202
        %v1500 = vsel %vm1495, %v1483, %v1204
        %v1501 = vsel %vm1495, %v1484, %v1206
        %v1502 = vsel %vm1495, %v1485, %v1208
        %v1503 = vsel %vm1495, %v1486, %v1210
        %v1504 = vsel %vm1495, %v1487, %v1212
        %v1505 = vsel %vm1495, %v1488, %v1214
        %v1506 = vsel %vm1495, %v1489, %v1216
        %v1507 = vsel %vm1495, %v1490, %v1218
        %v1508 = vsel %vm1495, %v1491, %v1220
        %v1509 = vsel %vm1495, %v1492, %v1222
        %v1510 = vsel %vm1495, %v1493, %v1224
        %v1511 = vsel %vm1495, %v1494, %v1226
        %vm1512 = vcmask 162816
        %v1513 = vsel %vm1512, %v1496, %v1244
        %v1514 = vsel %vm1512, %v1497, %v1246
        %v1515 = vsel %vm1512, %v1498, %v1248
        %v1516 = vsel %vm1512, %v1499, %v1250
        %v1517 = vsel %vm1512, %v1500, %v1252
        %v1518 = vsel %vm1512, %v1501, %v1254
        %v1519 = vsel %vm1512, %v1502, %v1256
        %v1520 = vsel %vm1512, %v1503, %v1258
        %v1521 = vsel %vm1512, %v1504, %v1260
        %v1522 = vsel %vm1512, %v1505, %v1262
        %v1523 = vsel %vm1512, %v1506, %v1264
        %v1524 = vsel %vm1512, %v1507, %v1266
        %v1525 = vsel %vm1512, %v1508, %v1268
        %v1526 = vsel %vm1512, %v1509, %v1270
        %v1527 = vsel %vm1512, %v1510, %v1272
        %v1528 = vsel %vm1512, %v1511, %v1274
        %vm1529 = vcmask 195584
        %v1530 = vsel %vm1529, %v1513, %v1300
        %v1531 = vsel %vm1529, %v1514, %v1302
        %v1532 = vsel %vm1529, %v1515, %v1304
        %v1533 = vsel %vm1529, %v1516, %v1306
        %v1534 = vsel %vm1529, %v1517, %v1308
        %v1535 = vsel %vm1529, %v1518, %v1310
        %v1536 = vsel %vm1529, %v1519, %v1312
        %v1537 = vsel %vm1529, %v1520, %v1314
        %v1538 = vsel %vm1529, %v1521, %v1316
        %v1539 = vsel %vm1529, %v1522, %v1318
        %v1540 = vsel %vm1529, %v1523, %v1320
        %v1541 = vsel %vm1529, %v1524, %v1322
        %v1542 = vsel %vm1529, %v1525, %v1324
        %v1543 = vsel %vm1529, %v1526, %v1326
        %v1544 = vsel %vm1529, %v1527, %v1328
        %v1545 = vsel %vm1529, %v1528, %v1330
        %vm1546 = vcmask 228352
        %v1547 = vsel %vm1546, %v1530, %v1349
        %v1548 = vsel %vm1546, %v1531, %v1351
        %v1549 = vsel %vm1546, %v1532, %v1353
        %v1550 = vsel %vm1546, %v1533, %v1355
        %v1551 = vsel %vm1546, %v1534, %v1357
        %v1552 = vsel %vm1546, %v1535, %v1359
        %v1553 = vsel %vm1546, %v1536, %v1361
        %v1554 = vsel %vm1546, %v1537, %v1363
        %v1555 = vsel %vm1546, %v1538, %v1365
        %v1556 = vsel %vm1546, %v1539, %v1367
        %v1557 = vsel %vm1546, %v1540, %v1369
        %v1558 = vsel %vm1546, %v1541, %v1371
        %v1559 = vsel %vm1546, %v1542, %v1373
        %v1560 = vsel %vm1546, %v1543, %v1375
        %v1561 = vsel %vm1546, %v1544, %v1377
        %v1562 = vsel %vm1546, %v1545, %v1379
        %vm1563 = vcmask 261120
        %v1564 = vsel %vm1563, %v1547, %v1398
        %v1565 = vsel %vm1563, %v1548, %v1400
        %v1566 = vsel %vm1563, %v1549, %v1402
        %v1567 = vsel %vm1563, %v1550, %v1404
        %v1568 = vsel %vm1563, %v1551, %v1406
        %v1569 = vsel %vm1563, %v1552, %v1408
        %v1570 = vsel %vm1563, %v1553, %v1410
        %v1571 = vsel %vm1563, %v1554, %v1412
        %v1572 = vsel %vm1563, %v1555, %v1414
        %v1573 = vsel %vm1563, %v1556, %v1416
        %v1574 = vsel %vm1563, %v1557, %v1418
        %v1575 = vsel %vm1563, %v1558, %v1420
        %v1576 = vsel %vm1563, %v1559, %v1422
        %v1577 = vsel %vm1563, %v1560, %v1424
        %v1578 = vsel %vm1563, %v1561, %v1426
        %v1579 = vsel %vm1563, %v1562, %v1428
        %v1580 = vld [vmem:[#allocation11] sm:$0xff]
        %v1581 = vld [vmem:[#allocation11 + $0x8] sm:$0xff]
        %v1582 = vld [vmem:[#allocation11 + $0x10] sm:$0xff]
        %v1583 = vld [vmem:[#allocation11 + $0x18] sm:$0xff]
        %v1584 = vld [vmem:[#allocation11 + $0x20] sm:$0xf]
        %v1585 = vld [vmem:[#allocation13] sm:$0x1]
        %v1587 = vlaneseq
        %v1588 = vshrl.u32 %v1587, 7
        %v1589 = vsub.s32 0, %v1588
        %v1590 = vrot.slane %v1585, %v1589
        %vm1592 = vcmask 293888
        %v1594 = vsel %vm1592, %v1564, 0
        %v1597 = vsel %vm1592, %v1565, 0
        %v1600 = vsel %vm1592, %v1566, 0
        %v1603 = vsel %vm1592, %v1567, 0
        %v1606 = vsel %vm1592, %v1568, 0
        %v1609 = vsel %vm1592, %v1569, 0
        %v1612 = vsel %vm1592, %v1570, 0
        %v1615 = vsel %vm1592, %v1571, 0
        %v1618 = vsel %vm1592, %v1572, 0
        %v1621 = vsel %vm1592, %v1573, 0
        %v1624 = vsel %vm1592, %v1574, 0
        %v1627 = vsel %vm1592, %v1575, 0
        %v1630 = vsel %vm1592, %v1576, 0
        %v1633 = vsel %vm1592, %v1577, 0
        %v1636 = vsel %vm1592, %v1578, 0
        %v1639 = vsel %vm1592, %v1579, 0
        %v1642 = vsel %vm564, %v1584, 0
        %1644 = vmatprep.subr.mxu0 0.0
        %1645 = vmatpush1.msra.mxu0 %v1580
        %1646 = vmatprep.subr.mxu0 0.0
        %1647 = vmatpush1.msra.mxu0 %v1581
        %1648 = vmatprep.subr.mxu0 0.0
        %1649 = vmatpush1.msra.mxu0 %v1582
        %1650 = vmatprep.subr.mxu0 0.0
        %1651 = vmatpush1.msra.mxu0 %v1583
        %1652 = vmatprep.subr.mxu0 0.0
        %1653 = vmatpush1.msra.mxu0 %v1642
        %1654 = vmatprep.subr.mxu0 0.0
        %1655 = vmatpush1.msra.mxu0 0.0
        %1656 = vmatprep.subr.mxu0 0.0
        %1657 = vmatpush1.msra.mxu0 0.0
        %1658 = vmatprep.subr.mxu0 0.0
        %1659 = vmatpush1.msra.mxu0 0.0
        %1660 = vmatprep.subr.mxu0 0.0
        %1661 = vmatpush1.msra.mxu0 0.0
        %1662 = vmatprep.subr.mxu0 0.0
        %1663 = vmatpush1.msra.mxu0 0.0
        %1664 = vmatprep.subr.mxu0 0.0
        %1665 = vmatpush1.msra.mxu0 0.0
        %1666 = vmatprep.subr.mxu0 0.0
        %1667 = vmatpush1.msra.mxu0 0.0
        %1668 = vmatprep.subr.mxu0 0.0
        %1669 = vmatpush1.msra.mxu0 0.0
        %1670 = vmatprep.subr.mxu0 0.0
        %1671 = vmatpush1.msra.mxu0 0.0
        %1672 = vmatprep.subr.mxu0 0.0
        %1673 = vmatpush1.msra.mxu0 0.0
        %1674 = vmatprep.subr.mxu0 0.0
        %1675 = vmatpush1.msra.mxu0 0.0
        %1676 = vmatprep.subr.mxu0 0.0
        %1677 = vmatpush1.msra.mxu0 0.0
        %1678 = vmatprep.subr.mxu0 0.0
        %1679 = vmatpush1.msra.mxu0 0.0
        %1680 = vmatprep.subr.mxu0 0.0
        %1681 = vmatpush1.msra.mxu0 0.0
        %1682 = vmatprep.subr.mxu0 0.0
        %1683 = vmatpush1.msra.mxu0 0.0
        %1684 = vmatprep.subr.mxu0 0.0
        %1685 = vmatpush1.msra.mxu0 0.0
        %1686 = vmatprep.subr.mxu0 0.0
        %1687 = vmatpush1.msra.mxu0 0.0
        %1688 = vmatprep.subr.mxu0 0.0
        %1689 = vmatpush1.msra.mxu0 0.0
        %1690 = vmatprep.subr.mxu0 0.0
        %1691 = vmatpush1.msra.mxu0 0.0
        %1692 = vmatprep.subr.mxu0 0.0
        %1693 = vmatpush1.msra.mxu0 0.0
        %1694 = vmatprep.subr.mxu0 0.0
        %1695 = vmatpush1.msra.mxu0 0.0
        %1696 = vmatprep.subr.mxu0 0.0
        %1697 = vmatpush1.msra.mxu0 0.0
        %1698 = vmatprep.subr.mxu0 0.0
        %1699 = vmatpush1.msra.mxu0 0.0
        %1700 = vmatprep.subr.mxu0 0.0
        %1701 = vmatpush1.msra.mxu0 0.0
        %1702 = vmatprep.subr.mxu0 0.0
        %1703 = vmatpush1.msra.mxu0 0.0
        %1704 = vmatprep.subr.mxu0 0.0
        %1705 = vmatpush1.msra.mxu0 0.0
        %1706 = vmatprep.subr.mxu0 0.0
        %1707 = vmatpush1.msra.mxu0 0.0
        %1708 = vmatprep.mubr.f32.mxu0 0.0
        %1709 = vmatmul.mubr.f32.gmra.mrb[0].mxu0 %v1594
        %v1710 = vpop.f32.mrb[0].mxu0
        %v1711 = vadd.f32 %v1590, %v1710
        %v1712 = vpop.f32.mrb[0].mxu0
        %1713 = vmatprep.mubr.f32.mxu0 0.0
        %1714 = vmatmul.mubr.f32.gmra.mrb[0].mxu0 %v1597
        %v1715 = vpop.f32.mrb[0].mxu0
        %v1716 = vadd.f32 %v1590, %v1715
        %v1717 = vpop.f32.mrb[0].mxu0
        %1718 = vmatprep.mubr.f32.mxu0 0.0
        %1719 = vmatmul.mubr.f32.gmra.mrb[0].mxu0 %v1600
        %v1720 = vpop.f32.mrb[0].mxu0
        %v1721 = vadd.f32 %v1590, %v1720
        %v1722 = vpop.f32.mrb[0].mxu0
        %1723 = vmatprep.mubr.f32.mxu0 0.0
        %1724 = vmatmul.mubr.f32.gmra.mrb[0].mxu0 %v1603
        %v1725 = vpop.f32.mrb[0].mxu0
        %v1726 = vadd.f32 %v1590, %v1725
        %v1727 = vpop.f32.mrb[0].mxu0
        %1728 = vmatprep.mubr.f32.mxu0 0.0
        %1729 = vmatmul.mubr.f32.gmra.mrb[0].mxu0 %v1606
        %v1730 = vpop.f32.mrb[0].mxu0
        %v1731 = vadd.f32 %v1590, %v1730
        %v1732 = vpop.f32.mrb[0].mxu0
        %1733 = vmatprep.mubr.f32.mxu0 0.0
        %1734 = vmatmul.mubr.f32.gmra.mrb[0].mxu0 %v1609
        %v1735 = vpop.f32.mrb[0].mxu0
        %v1736 = vadd.f32 %v1590, %v1735
        %v1737 = vpop.f32.mrb[0].mxu0
        %1738 = vmatprep.mubr.f32.mxu0 0.0
        %1739 = vmatmul.mubr.f32.gmra.mrb[0].mxu0 %v1612
        %v1740 = vpop.f32.mrb[0].mxu0
        %v1741 = vadd.f32 %v1590, %v1740
        %v1742 = vpop.f32.mrb[0].mxu0
        %1743 = vmatprep.mubr.f32.mxu0 0.0
        %1744 = vmatmul.mubr.f32.gmra.mrb[0].mxu0 %v1615
        %v1745 = vpop.f32.mrb[0].mxu0
        %v1746 = vadd.f32 %v1590, %v1745
        %v1747 = vpop.f32.mrb[0].mxu0
        %1748 = vmatprep.mubr.f32.mxu0 0.0
        %1749 = vmatmul.mubr.f32.gmra.mrb[0].mxu0 %v1618
        %v1750 = vpop.f32.mrb[0].mxu0
        %v1751 = vadd.f32 %v1590, %v1750
        %v1752 = vpop.f32.mrb[0].mxu0
        %1753 = vmatprep.mubr.f32.mxu0 0.0
        %1754 = vmatmul.mubr.f32.gmra.mrb[0].mxu0 %v1621
        %v1755 = vpop.f32.mrb[0].mxu0
        %v1756 = vadd.f32 %v1590, %v1755
        %v1757 = vpop.f32.mrb[0].mxu0
        %1758 = vmatprep.mubr.f32.mxu0 0.0
        %1759 = vmatmul.mubr.f32.gmra.mrb[0].mxu0 %v1624
        %v1760 = vpop.f32.mrb[0].mxu0
        %v1761 = vadd.f32 %v1590, %v1760
        %v1762 = vpop.f32.mrb[0].mxu0
        %1763 = vmatprep.mubr.f32.mxu0 0.0
        %1764 = vmatmul.mubr.f32.gmra.mrb[0].mxu0 %v1627
        %v1765 = vpop.f32.mrb[0].mxu0
        %v1766 = vadd.f32 %v1590, %v1765
        %v1767 = vpop.f32.mrb[0].mxu0
        %1768 = vmatprep.mubr.f32.mxu0 0.0
        %1769 = vmatmul.mubr.f32.gmra.mrb[0].mxu0 %v1630
        %v1770 = vpop.f32.mrb[0].mxu0
        %v1771 = vadd.f32 %v1590, %v1770
        %v1772 = vpop.f32.mrb[0].mxu0
        %1773 = vmatprep.mubr.f32.mxu0 0.0
        %1774 = vmatmul.mubr.f32.gmra.mrb[0].mxu0 %v1633
        %v1775 = vpop.f32.mrb[0].mxu0
        %v1776 = vadd.f32 %v1590, %v1775
        %v1777 = vpop.f32.mrb[0].mxu0
        %1778 = vmatprep.mubr.f32.mxu0 0.0
        %1779 = vmatmul.mubr.f32.gmra.mrb[0].mxu0 %v1636
        %v1780 = vpop.f32.mrb[0].mxu0
        %v1781 = vadd.f32 %v1590, %v1780
        %v1782 = vpop.f32.mrb[0].mxu0
        %1783 = vmatprep.mubr.f32.mxu0 0.0
        %1784 = vmatmul.mubr.f32.gmra.mrb[0].mxu0 %v1639
        %v1785 = vpop.f32.mrb[0].mxu0
        %v1786 = vadd.f32 %v1590, %v1785
        %v1787 = vpop.f32.mrb[0].mxu0
        %1788 = vdwg.mxu0
        %v1789 = vmax.f32 %v1711, 0.0
        %v1790 = vmax.f32 %v1716, 0.0
        %v1791 = vmax.f32 %v1721, 0.0
        %v1792 = vmax.f32 %v1726, 0.0
        %v1793 = vmax.f32 %v1731, 0.0
        %v1794 = vmax.f32 %v1736, 0.0
        %v1795 = vmax.f32 %v1741, 0.0
        %v1796 = vmax.f32 %v1746, 0.0
        %v1797 = vmax.f32 %v1751, 0.0
        %v1798 = vmax.f32 %v1756, 0.0
        %v1799 = vmax.f32 %v1761, 0.0
        %v1800 = vmax.f32 %v1766, 0.0
        %v1801 = vmax.f32 %v1771, 0.0
        %v1802 = vmax.f32 %v1776, 0.0
        %v1803 = vmax.f32 %v1781, 0.0
        %v1804 = vmax.f32 %v1786, 0.0
        %1805 = vst.msk [vmem:[%s476] sm:$0xff] %vm1495, %v1789
        %1806 = vst.msk [vmem:[%s476 + $0x8] sm:$0xff] %vm1495, %v1790
        %1807 = vst.msk [vmem:[%s476 + $0x10] sm:$0xff] %vm1495, %v1791
        %1808 = vst.msk [vmem:[%s476 + $0x18] sm:$0xff] %vm1495, %v1792
        %1809 = vst.msk [vmem:[%s476 + $0x20] sm:$0xff] %vm1495, %v1793
        %1810 = vst.msk [vmem:[%s476 + $0x28] sm:$0xff] %vm1495, %v1794
        %1811 = vst.msk [vmem:[%s476 + $0x30] sm:$0xff] %vm1495, %v1795
        %1812 = vst.msk [vmem:[%s476 + $0x38] sm:$0xff] %vm1495, %v1796
        %1813 = vst.msk [vmem:[%s476 + $0x40] sm:$0xff] %vm1495, %v1797
        %1814 = vst.msk [vmem:[%s476 + $0x48] sm:$0xff] %vm1495, %v1798
        %1815 = vst.msk [vmem:[%s476 + $0x50] sm:$0xff] %vm1495, %v1799
        %1816 = vst.msk [vmem:[%s476 + $0x58] sm:$0xff] %vm1495, %v1800
        %1817 = vst.msk [vmem:[%s476 + $0x60] sm:$0xff] %vm1495, %v1801
        %1818 = vst.msk [vmem:[%s476 + $0x68] sm:$0xff] %vm1495, %v1802
        %1819 = vst.msk [vmem:[%s476 + $0x70] sm:$0xff] %vm1495, %v1803
        %1820 = vst.msk [vmem:[%s476 + $0x78] sm:$0xff] %vm1495, %v1804
        %s1821 = sand.u32 %s235, 1
        %s1822 = scalar_lea.sflag [#allocation4], %s1821
        %s1823 = sand.u32 %s235, 1
        %s1824 = smul.addr %s1823, 128
        %s1825 = scalar_lea.vmem [#allocation14], %s1824
        // Predicated region
        $region77: #{fire_forward.1} parent=47 // pred_check
          %p1826 = pneg %p245
        $region78: #{fire_forward.1} parent=47 // pred_check_branch
          %1828 = sbr.rel (%p1826) target = $region80
        $region79: #{fire_forward.1} parent=47 // pred_region
          %s1829 = smul.u32 8, %s34
          %s1831 = ssub.s32 2048, 2048
          %1832 = vsyncadd %s1822, %s1831
          %s1833 = smul.addr %s1829, 2
          %s1834 = smul.addr %s33, 32
          %s1835 = sadd.s32 %s1833, %s1834
          %s1836 = smul.addr %s1835, 128
          %s1837 = scalar_lea.hbm %s7, %s1836
          %s1838 = sshll.u32 %s1825, 4
          %s1839 = int_to_ptr.vmem [resolvable:$true] %s1838
          %1844 = dma.vmem_to_hbm [thread:$0]  %s1839, 2048, %s1837, %s1822, 128, 128, 8
        $region80: #{fire_forward.1} parent=47 // pred_fallthru
          _
      $region48: #{fire_forward.1} parent=5 // pred_fallthru
        _
      %p1845 = scmp.le.s32.totalorder 2, %s24
      // Predicated region
      $region81: #{fire_forward.1} parent=5 // pred_check
        %p1846 = pneg %p1845
      $region82: #{fire_forward.1} parent=5 // pred_check_branch
        %1848 = sbr.rel (%p1846) target = $region84
      $region83: #{fire_forward.1} parent=5 // pred_region
        %s1849 = ssub.s32 %s24, 2
        // Predicated region
        $region85: #{fire_forward.1} parent=83 // pred_check
          %p1850 = pneg %p251
        $region86: #{fire_forward.1} parent=83 // pred_check_branch
          %1852 = sbr.rel (%p1850) target = $region88
        $region87: #{fire_forward.1} parent=83 // pred_region
          %s1853 = sand.u32 %s236, 1
          %s1854 = scalar_lea.sflag [#allocation4], %s1853
          %s1855 = sand.u32 %s236, 1
          %s1856 = smul.addr %s1855, 128
          %s1857 = scalar_lea.vmem [#allocation14], %s1856
          %1858 = dma.done %s1854, 2048
        $region88: #{fire_forward.1} parent=83 // pred_fallthru
          _
      $region84: #{fire_forward.1} parent=5 // pred_fallthru
        _
    $region6: #{fire_forward.1} parent=1 // loop_footer
      %s28 = sadd.s32 1, %s24
    $region7: #{fire_forward.1} parent=1 // loop_footer_branch
      %23 = sbr.rel target = $region3
    $region8: #{fire_forward.1} parent=1 // loop_exit
      _
    %1859 = vsyncpa [#allocation3], 1
    %s1860 = scalar_lea.sflag [#allocation3], 1
    %1861 = vsyncpa %s1860, 1
    %1862 = vsyncpa [#allocation6], 1
    %s1863 = scalar_lea.sflag [#allocation6], 1
    %1864 = vsyncpa %s1863, 1
    %1865 = vsyncpa [#allocation9], 1
    %1866 = vsyncpa [#allocation12], 1
    %1867 = vsyncpa [#allocation4], 1
    %s1868 = scalar_lea.sflag [#allocation4], 1
    %1869 = vsyncpa %s1868, 1

</llo_original>
